<compile_context>
chip_gen: v7x
topology: tpu7x:2x2x1
jax: 0.10.0
libtpu: 0.0.40
codegen_flags: <defaults>
</compile_context>

<pallas_src>
import numpy as np
import jax
import jax.numpy as jnp
from jax.experimental import pallas as pl
from jax.experimental.pallas import tpu as pltpu


def _make_row_conv_slab(w_hwio, width):
    """Fold a (3,3,Cin,Cout) HWIO kernel into a lane-dense row-matmul slab.

    Returns a (3*W*Cin, W*Cout) f32 matrix.  Block dh (rows dh*W*Cin:(dh+1)*W*Cin) maps the
    flattened input row x[i+dh-1] (layout [w, cin]) to the flattened output row out[i]
    (layout [w, cout]); SAME padding along W is baked in as structural zeros.
    """
    w = np.asarray(w_hwio, dtype=np.float32)
    kh, kw, cin, cout = w.shape
    slab = np.zeros((kh, width * cin, width * cout), dtype=np.float32)
    for dh in range(kh):
        for dw in range(kw):
            for wo in range(width):
                wi = wo + dw - 1
                if 0 <= wi < width:
                    slab[dh, wi * cin:(wi + 1) * cin,
                         wo * cout:(wo + 1) * cout] = w[dh, dw]
    return jnp.asarray(slab.reshape(kh * width * cin, width * cout))


def _fused_conv_kernel(x_ref, w1_ref, b1_ref, w2_ref, b2_ref, f1_ref, f2_ref):
    """conv1 -> ReLU -> conv2 for one batch element, lane-dense row layout.

    x_ref : (1, H, W*Cin)      input rows
    w1_ref: (3*W*Cin,  W*Cmid) conv1 row slab      b1_ref: (1, W*Cmid)
    w2_ref: (3*W*Cmid, W*Cout) conv2 row slab      b2_ref: (1, W*Cout)
    f1_ref: (1, H, W*Cmid)     conv1 output (pre-ReLU, the hooked feature)
    f2_ref: (1, H, W*Cout)     conv2 output (pre-ReLU, the hooked feature)
    """
    H = x_ref.shape[1]

    # Exact 0/1 row-shift matrices (built once, reused by both layers).
    ri = jax.lax.broadcasted_iota(jnp.int32, (H, H), 0)
    ci = jax.lax.broadcasted_iota(jnp.int32, (H, H), 1)
    s_up = jnp.where(ri == ci + 1, 1.0, 0.0).astype(jnp.float32)  # (s_up@x)[i] = x[i-1], 0 at i=0
    s_dn = jnp.where(ri + 1 == ci, 1.0, 0.0).astype(jnp.float32)  # (s_dn@x)[i] = x[i+1], 0 at i=H-1

    def conv_rows(rows, w_ref_, b_row):
        wc = rows.shape[1]
        up = jnp.dot(s_up, rows, preferred_element_type=jnp.float32)   # row i-1 (zero halo)
        dn = jnp.dot(s_dn, rows, preferred_element_type=jnp.float32)   # row i+1 (zero halo)
        acc = b_row + jnp.dot(up, w_ref_[0 * wc:1 * wc, :],
                              preferred_element_type=jnp.float32)
        acc = acc + jnp.dot(rows, w_ref_[1 * wc:2 * wc, :],
                            preferred_element_type=jnp.float32)
        acc = acc + jnp.dot(dn, w_ref_[2 * wc:3 * wc, :],
                            preferred_element_type=jnp.float32)
        return acc

    x = x_ref[0]                                    # (H, W*Cin)
    f1 = conv_rows(x, w1_ref, b1_ref[...])          # (H, W*Cmid) f32
    f1_ref[0] = f1.astype(f1_ref.dtype)
    h = jnp.maximum(f1, 0.0)                        # in-kernel ReLU (VPU), stays in VMEM
    f2 = conv_rows(h, w2_ref, b2_ref[...])          # (H, W*Cout) f32
    f2_ref[0] = f2.astype(f2_ref.dtype)
    # TODO(synk): the model's final ReLU output is discarded by the hooks, so it is not computed.


def fused_conv_features(x_rows, w1_slab, b1_row, w2_slab, b2_row):
    """One fused pallas_call returning (feat1_rows, feat2_rows), both (B, H, W*C)."""
    B, H, WCin = x_rows.shape
    WCmid = w1_slab.shape[1]
    WCout = w2_slab.shape[1]
    return pl.pallas_call(
        _fused_conv_kernel,
        out_shape=(
            jax.ShapeDtypeStruct((B, H, WCmid), jnp.float32),
            jax.ShapeDtypeStruct((B, H, WCout), jnp.float32),
        ),
        grid_spec=pltpu.PrefetchScalarGridSpec(
            num_scalar_prefetch=0,
            grid=(B,),
            in_specs=[
                pl.BlockSpec((1, H, WCin), lambda b: (b, 0, 0)),
                pl.BlockSpec(w1_slab.shape, lambda b: (0, 0)),
                pl.BlockSpec(b1_row.shape, lambda b: (0, 0)),
                pl.BlockSpec(w2_slab.shape, lambda b: (0, 0)),
                pl.BlockSpec(b2_row.shape, lambda b: (0, 0)),
            ],
            out_specs=(
                pl.BlockSpec((1, H, WCmid), lambda b: (b, 0, 0)),
                pl.BlockSpec((1, H, WCout), lambda b: (b, 0, 0)),
            ),
        ),
        compiler_params=pltpu.CompilerParams(
            dimension_semantics=("parallel",)),
    )(x_rows, w1_slab, b1_row, w2_slab, b2_row)


class FeatureExtractorJax:
    """JAX/Pallas analogue of FeatureExtractor wrapping a tiny 2-conv CNN.

    forward(x_nchw) -> {"conv1": (B,Cmid,H,W), "conv2": (B,Cout,H,W)}
    where the captured features are the Conv2d outputs (what forward hooks on the
    conv modules would record).
    """

    def __init__(self, c_in=4, c_mid=8, c_out=8, width=16, seed=0):
        k1, k2, k3, k4 = jax.random.split(jax.random.PRNGKey(seed), 4)
        # Deterministic synthetic parameters (HWIO layout).
        self.w1 = jax.random.normal(k1, (3, 3, c_in, c_mid), jnp.float32) * 0.1
        self.b1 = jax.random.normal(k2, (c_mid,), jnp.float32) * 0.1
        self.w2 = jax.random.normal(k3, (3, 3, c_mid, c_out), jnp.float32) * 0.1
        self.b2 = jax.random.normal(k4, (c_out,), jnp.float32) * 0.1
        self.c_in, self.c_mid, self.c_out, self.width = c_in, c_mid, c_out, width
        # Lane-dense weight slabs / bias rows, built once in the wrapper.
        self.w1_slab = _make_row_conv_slab(self.w1, width)            # (3*W*Cin,  W*Cmid)
        self.w2_slab = _make_row_conv_slab(self.w2, width)            # (3*W*Cmid, W*Cout)
        self.b1_row = jnp.tile(self.b1, width).reshape(1, width * c_mid)
        self.b2_row = jnp.tile(self.b2, width).reshape(1, width * c_out)
        self.layers = ("conv1", "conv2")

    def forward(self, x_nchw):
        B, C, H, W = x_nchw.shape
        assert C == self.c_in and W == self.width
        # NCHW -> lane-dense rows (B, H, W*Cin).
        x_rows = jnp.transpose(x_nchw, (0, 2, 3, 1)).reshape(B, H, W * C)
        f1_rows, f2_rows = fused_conv_features(
            x_rows, self.w1_slab, self.b1_row, self.w2_slab, self.b2_row)
        # Back to PyTorch's NCHW convention for the returned features.
        feat1 = jnp.transpose(f1_rows.reshape(B, H, W, self.c_mid), (0, 3, 1, 2))
        feat2 = jnp.transpose(f2_rows.reshape(B, H, W, self.c_out), (0, 3, 1, 2))
        return {"conv1": feat1, "conv2": feat2}


def _reference_conv3x3(x_nhwc, w_hwio, b):
    out = jax.lax.conv_general_dilated(
        x_nhwc, w_hwio, window_strides=(1, 1), padding="SAME",
        dimension_numbers=("NHWC", "HWIO", "NHWC"))
    return out + b[None, None, None, :]


if __name__ == "__main__":
    B, C, Hs, Ws = 2, 4, 16, 16
    x = jax.random.normal(jax.random.PRNGKey(0), (B, C, Hs, Ws), jnp.float32)

    fe = FeatureExtractorJax(c_in=C, c_mid=8, c_out=8, width=Ws, seed=0)
    feats = fe.forward(x)
    jax.block_until_ready(feats)

    # Sanity check against the XLA reference convs.
    x_nhwc = jnp.transpose(x, (0, 2, 3, 1))
    ref1 = _reference_conv3x3(x_nhwc, fe.w1, fe.b1)
    ref2 = _reference_conv3x3(jnp.maximum(ref1, 0.0), fe.w2, fe.b2)
    ref = {
        "conv1": jnp.transpose(ref1, (0, 3, 1, 2)),
        "conv2": jnp.transpose(ref2, (0, 3, 1, 2)),
    }
    for name in fe.layers:
        assert feats[name].shape == ref[name].shape, (feats[name].shape, ref[name].shape)
        err = float(jnp.max(jnp.abs(feats[name] - ref[name])))
        assert err < 2e-4, (name, err)

    print("KERNEL_OK")
</pallas_src>

<mosaic_0001>
module attributes {stable_mosaic.version = 11 : i64} {
  func.func @_fused_conv_kernel(%arg0: i32, %arg1: memref<1x16x64xf32, #tpu.memory_space<vmem>>, %arg2: memref<192x128xf32, #tpu.memory_space<vmem>>, %arg3: memref<1x128xf32, #tpu.memory_space<vmem>>, %arg4: memref<384x128xf32, #tpu.memory_space<vmem>>, %arg5: memref<1x128xf32, #tpu.memory_space<vmem>>, %arg6: memref<1x16x128xf32, #tpu.memory_space<vmem>>, %arg7: memref<1x16x128xf32, #tpu.memory_space<vmem>>) attributes {dimension_semantics = [#tpu.dimension_semantics<parallel>], iteration_bounds = array<i64: 2>, scalar_prefetch = 0 : i64, scratch_operands = 0 : i64, tpu.core_type = #tpu.core_type<tc>, window_params = [{transform_indices = @transform_0, window_bounds = array<i64: 1, 16, 64>}, {pipeline_mode = #tpu.pipeline_mode<synchronous>, transform_indices = @transform_1, window_bounds = array<i64: 192, 128>}, {pipeline_mode = #tpu.pipeline_mode<synchronous>, transform_indices = @transform_2, window_bounds = array<i64: 1, 128>}, {pipeline_mode = #tpu.pipeline_mode<synchronous>, transform_indices = @transform_3, window_bounds = array<i64: 384, 128>}, {pipeline_mode = #tpu.pipeline_mode<synchronous>, transform_indices = @transform_4, window_bounds = array<i64: 1, 128>}, {transform_indices = @transform_5, window_bounds = array<i64: 1, 16, 128>}, {transform_indices = @transform_6, window_bounds = array<i64: 1, 16, 128>}]} {
    %0 = tpu.iota {dimensions = array<i32: 0>} : vector<16x16xi32>
    %1 = tpu.iota {dimensions = array<i32: 1>} : vector<16x16xi32>
    %c1_i32 = arith.constant 1 : i32
    %2 = vector.broadcast %c1_i32 : i32 to vector<16x16xi32>
    %3 = arith.addi %1, %2 : vector<16x16xi32>
    %4 = arith.cmpi eq, %0, %3 : vector<16x16xi32>
    %cst = arith.constant 1.000000e+00 : f32
    %cst_0 = arith.constant 0.000000e+00 : f32
    %5 = vector.broadcast %cst : f32 to vector<16x16xf32>
    %6 = vector.broadcast %cst_0 : f32 to vector<16x16xf32>
    %7 = arith.select %4, %5, %6 : vector<16x16xi1>, vector<16x16xf32>
    %c1_i32_1 = arith.constant 1 : i32
    %8 = vector.broadcast %c1_i32_1 : i32 to vector<16x16xi32>
    %9 = arith.addi %0, %8 : vector<16x16xi32>
    %10 = arith.cmpi eq, %9, %1 : vector<16x16xi32>
    %cst_2 = arith.constant 1.000000e+00 : f32
    %cst_3 = arith.constant 0.000000e+00 : f32
    %11 = vector.broadcast %cst_2 : f32 to vector<16x16xf32>
    %12 = vector.broadcast %cst_3 : f32 to vector<16x16xf32>
    %13 = arith.select %10, %11, %12 : vector<16x16xi1>, vector<16x16xf32>
    %c0 = arith.constant 0 : index
    %c0_4 = arith.constant 0 : index
    %c0_5 = arith.constant 0 : index
    %14 = vector.load %arg1[%c0, %c0_4, %c0_5] : memref<1x16x64xf32, #tpu.memory_space<vmem>>, vector<1x16x64xf32>
    %15 = vector.shape_cast %14 : vector<1x16x64xf32> to vector<16x64xf32>
    %c0_6 = arith.constant 0 : index
    %c0_7 = arith.constant 0 : index
    %16 = vector.load %arg3[%c0_6, %c0_7] : memref<1x128xf32, #tpu.memory_space<vmem>>, vector<1x128xf32>
    %cst_8 = arith.constant dense<0.000000e+00> : vector<16x64xf32>
    %17 = tpu.matmul %7, %15, %cst_8 {dimension_numbers = #tpu.dot_dimension_numbers<[1], [0], [0], [1], [0, 0, 1, 1], [], []>} : vector<16x16xf32>, vector<16x64xf32>, vector<16x64xf32> -> vector<16x64xf32>
    %cst_9 = arith.constant dense<0.000000e+00> : vector<16x64xf32>
    %18 = tpu.matmul %13, %15, %cst_9 {dimension_numbers = #tpu.dot_dimension_numbers<[1], [0], [0], [1], [0, 0, 1, 1], [], []>} : vector<16x16xf32>, vector<16x64xf32>, vector<16x64xf32> -> vector<16x64xf32>
    %c0_10 = arith.constant 0 : index
    %c0_11 = arith.constant 0 : index
    %19 = vector.load %arg2[%c0_10, %c0_11] : memref<192x128xf32, #tpu.memory_space<vmem>>, vector<64x128xf32>
    %cst_12 = arith.constant dense<0.000000e+00> : vector<16x128xf32>
    %20 = tpu.matmul %17, %19, %cst_12 {dimension_numbers = #tpu.dot_dimension_numbers<[1], [0], [0], [1], [0, 0, 1, 1], [], []>} : vector<16x64xf32>, vector<64x128xf32>, vector<16x128xf32> -> vector<16x128xf32>
    %21 = vector.broadcast %16 : vector<1x128xf32> to vector<16x128xf32>
    %22 = arith.addf %21, %20 : vector<16x128xf32>
    %c64 = arith.constant 64 : index
    %c0_13 = arith.constant 0 : index
    %23 = vector.load %arg2[%c64, %c0_13] : memref<192x128xf32, #tpu.memory_space<vmem>>, vector<64x128xf32>
    %cst_14 = arith.constant dense<0.000000e+00> : vector<16x128xf32>
    %24 = tpu.matmul %15, %23, %cst_14 {dimension_numbers = #tpu.dot_dimension_numbers<[1], [0], [0], [1], [0, 0, 1, 1], [], []>} : vector<16x64xf32>, vector<64x128xf32>, vector<16x128xf32> -> vector<16x128xf32>
    %25 = arith.addf %22, %24 : vector<16x128xf32>
    %c128 = arith.constant 128 : index
    %c0_15 = arith.constant 0 : index
    %26 = vector.load %arg2[%c128, %c0_15] : memref<192x128xf32, #tpu.memory_space<vmem>>, vector<64x128xf32>
    %cst_16 = arith.constant dense<0.000000e+00> : vector<16x128xf32>
    %27 = tpu.matmul %18, %26, %cst_16 {dimension_numbers = #tpu.dot_dimension_numbers<[1], [0], [0], [1], [0, 0, 1, 1], [], []>} : vector<16x64xf32>, vector<64x128xf32>, vector<16x128xf32> -> vector<16x128xf32>
    %28 = arith.addf %25, %27 : vector<16x128xf32>
    %c0_17 = arith.constant 0 : index
    %c0_18 = arith.constant 0 : index
    %c0_19 = arith.constant 0 : index
    %29 = vector.load %arg6[%c0_17, %c0_18, %c0_19] : memref<1x16x128xf32, #tpu.memory_space<vmem>>, vector<1x16x128xf32>
    %30 = vector.shape_cast %29 : vector<1x16x128xf32> to vector<16x128xf32>
    %31 = vector.shape_cast %28 : vector<16x128xf32> to vector<1x16x128xf32>
    tpu.vector_store %arg6[%c0_17, %c0_18, %c0_19], %31 {strides = array<i32>} : memref<1x16x128xf32, #tpu.memory_space<vmem>>, vector<1x16x128xf32>,
    %cst_20 = arith.constant 0.000000e+00 : f32
    %32 = vector.broadcast %cst_20 : f32 to vector<16x128xf32>
    %33 = arith.maximumf %28, %32 : vector<16x128xf32>
    %c0_21 = arith.constant 0 : index
    %c0_22 = arith.constant 0 : index
    %34 = vector.load %arg5[%c0_21, %c0_22] : memref<1x128xf32, #tpu.memory_space<vmem>>, vector<1x128xf32>
    %cst_23 = arith.constant dense<0.000000e+00> : vector<16x128xf32>
    %35 = tpu.matmul %7, %33, %cst_23 {dimension_numbers = #tpu.dot_dimension_numbers<[1], [0], [0], [1], [0, 0, 1, 1], [], []>} : vector<16x16xf32>, vector<16x128xf32>, vector<16x128xf32> -> vector<16x128xf32>
    %cst_24 = arith.constant dense<0.000000e+00> : vector<16x128xf32>
    %36 = tpu.matmul %13, %33, %cst_24 {dimension_numbers = #tpu.dot_dimension_numbers<[1], [0], [0], [1], [0, 0, 1, 1], [], []>} : vector<16x16xf32>, vector<16x128xf32>, vector<16x128xf32> -> vector<16x128xf32>
    %c0_25 = arith.constant 0 : index
    %c0_26 = arith.constant 0 : index
    %37 = vector.load %arg4[%c0_25, %c0_26] : memref<384x128xf32, #tpu.memory_space<vmem>>, vector<128x128xf32>
    %cst_27 = arith.constant dense<0.000000e+00> : vector<16x128xf32>
    %38 = tpu.matmul %35, %37, %cst_27 {dimension_numbers = #tpu.dot_dimension_numbers<[1], [0], [0], [1], [0, 0, 1, 1], [], []>} : vector<16x128xf32>, vector<128x128xf32>, vector<16x128xf32> -> vector<16x128xf32>
    %39 = vector.broadcast %34 : vector<1x128xf32> to vector<16x128xf32>
    %40 = arith.addf %39, %38 : vector<16x128xf32>
    %c128_28 = arith.constant 128 : index
    %c0_29 = arith.constant 0 : index
    %41 = vector.load %arg4[%c128_28, %c0_29] : memref<384x128xf32, #tpu.memory_space<vmem>>, vector<128x128xf32>
    %cst_30 = arith.constant dense<0.000000e+00> : vector<16x128xf32>
    %42 = tpu.matmul %33, %41, %cst_30 {dimension_numbers = #tpu.dot_dimension_numbers<[1], [0], [0], [1], [0, 0, 1, 1], [], []>} : vector<16x128xf32>, vector<128x128xf32>, vector<16x128xf32> -> vector<16x128xf32>
    %43 = arith.addf %40, %42 : vector<16x128xf32>
    %c256 = arith.constant 256 : index
    %c0_31 = arith.constant 0 : index
    %44 = vector.load %arg4[%c256, %c0_31] : memref<384x128xf32, #tpu.memory_space<vmem>>, vector<128x128xf32>
    %cst_32 = arith.constant dense<0.000000e+00> : vector<16x128xf32>
    %45 = tpu.matmul %36, %44, %cst_32 {dimension_numbers = #tpu.dot_dimension_numbers<[1], [0], [0], [1], [0, 0, 1, 1], [], []>} : vector<16x128xf32>, vector<128x128xf32>, vector<16x128xf32> -> vector<16x128xf32>
    %46 = arith.addf %43, %45 : vector<16x128xf32>
    %c0_33 = arith.constant 0 : index
    %c0_34 = arith.constant 0 : index
    %c0_35 = arith.constant 0 : index
    %47 = vector.load %arg7[%c0_33, %c0_34, %c0_35] : memref<1x16x128xf32, #tpu.memory_space<vmem>>, vector<1x16x128xf32>
    %48 = vector.shape_cast %47 : vector<1x16x128xf32> to vector<16x128xf32>
    %49 = vector.shape_cast %46 : vector<16x128xf32> to vector<1x16x128xf32>
    tpu.vector_store %arg7[%c0_33, %c0_34, %c0_35], %49 {strides = array<i32>} : memref<1x16x128xf32, #tpu.memory_space<vmem>>, vector<1x16x128xf32>,
    return
  }
  func.func @transform_0(%arg0: i32) -> (i32, i32, i32) {
    %c0_i32 = arith.constant 0 : i32
    %c0_i32_0 = arith.constant 0 : i32
    %c0_i32_1 = arith.constant 0 : i32
    return %arg0, %c0_i32, %c0_i32_0 : i32, i32, i32
  }
  func.func @transform_1(%arg0: i32) -> (i32, i32) {
    %c0_i32 = arith.constant 0 : i32
    %c0_i32_0 = arith.constant 0 : i32
    %c0_i32_1 = arith.constant 0 : i32
    return %c0_i32, %c0_i32_0 : i32, i32
  }
  func.func @transform_2(%arg0: i32) -> (i32, i32) {
    %c0_i32 = arith.constant 0 : i32
    %c0_i32_0 = arith.constant 0 : i32
    %c0_i32_1 = arith.constant 0 : i32
    return %c0_i32, %c0_i32_0 : i32, i32
  }
  func.func @transform_3(%arg0: i32) -> (i32, i32) {
    %c0_i32 = arith.constant 0 : i32
    %c0_i32_0 = arith.constant 0 : i32
    %c0_i32_1 = arith.constant 0 : i32
    return %c0_i32, %c0_i32_0 : i32, i32
  }
  func.func @transform_4(%arg0: i32) -> (i32, i32) {
    %c0_i32 = arith.constant 0 : i32
    %c0_i32_0 = arith.constant 0 : i32
    %c0_i32_1 = arith.constant 0 : i32
    return %c0_i32, %c0_i32_0 : i32, i32
  }
  func.func @transform_5(%arg0: i32) -> (i32, i32, i32) {
    %c0_i32 = arith.constant 0 : i32
    %c0_i32_0 = arith.constant 0 : i32
    %c0_i32_1 = arith.constant 0 : i32
    return %arg0, %c0_i32, %c0_i32_0 : i32, i32, i32
  }
  func.func @transform_6(%arg0: i32) -> (i32, i32, i32) {
    %c0_i32 = arith.constant 0 : i32
    %c0_i32_0 = arith.constant 0 : i32
    %c0_i32_1 = arith.constant 0 : i32
    return %arg0, %c0_i32, %c0_i32_0 : i32, i32, i32
  }
}

</mosaic_0001>

<llo_original>
// kernel: tpu_custom_call.1
$region0: #{tpu_custom_call.1}
  #allocation0 [shape = 'u32[]', space=smem, size = 0x4, offset = 0x4, fixed_abs, tag = 'smem constant byte address 0x4 - core index']
  #allocation1 [shape = 'u32[144,128]{1,0:T(1,128)}', space=vmem, size = 0x12000, scoped, tag = 'internal scratch']
  %s0 = inlined_call_operand.hbm [shape: f32[2,16,64], index: 0, kind: input, shape index: {}]
  %s1 = inlined_call_operand.hbm [shape: f32[192,128], index: 1, kind: input, shape index: {}]
  %s2 = inlined_call_operand.vmem [shape: f32[1,128], index: 2, kind: input, shape index: {}]
  %s3 = inlined_call_operand.hbm [shape: f32[384,128], index: 3, kind: input, shape index: {}]
  %s4 = inlined_call_operand.vmem [shape: f32[1,128], index: 4, kind: input, shape index: {}]
  %s5 = inlined_call_operand.hbm [shape: f32[2,16,128], index: 5, kind: output, shape index: {0}]
  %s6 = inlined_call_operand.hbm [shape: f32[2,16,128], index: 6, kind: output, shape index: {1}]
  %7 = xla_tuple %s5, %s6
  %s8 = sld [smem:[#allocation0]]
  $region73: #{tpu_custom_call.1} parent=0
    _
  %s10 = ssub.s32 1, %s8
  %s11 = scalar_select 0, %s10, %s8
  $region1: #{tpu_custom_call.1} parent=0
    #allocation2 [shape = 'u8[16384]{0}', space=vmem, size = 0x4000, scoped, tag = 'input window, operand 0']
    #allocation3 [shape = 's32[2]{0}', space=sflag, size = 0x8, scoped, tag = 'scoped memory for tpu_custom_call.1']
    #allocation4 [shape = 's32[2]{0}', space=sflag, size = 0x8, scoped, tag = 'scoped memory for tpu_custom_call.1']
    #allocation5 [shape = 'u8[98304]{0}', space=vmem, size = 0x18000, scoped, tag = 'input window, operand 1, single buffered']
    #allocation6 [shape = 's32[1]{0}', space=sflag, size = 0x4, scoped, tag = 'scoped memory for tpu_custom_call.1']
    #allocation7 [shape = 'u8[196608]{0}', space=vmem, size = 0x30000, scoped, tag = 'input window, operand 3, single buffered']
    #allocation8 [shape = 'u8[16384]{0}', space=vmem, size = 0x4000, scoped, tag = 'output window, operand 0']
    #allocation9 [shape = 'u8[16384]{0}', space=vmem, size = 0x4000, scoped, tag = 'output window, operand 1']
    #allocation10 [shape = 's32[2]{0}', space=sflag, size = 0x8, scoped, tag = 'scoped memory for tpu_custom_call.1']
    %12 = vsyncpa [#allocation3], 0
    %s13 = scalar_lea.sflag [#allocation3], 1
    %14 = vsyncpa %s13, 0
    %15 = vsyncpa [#allocation6], 0
    %16 = vsyncpa [#allocation4], 0
    %s17 = scalar_lea.sflag [#allocation4], 1
    %18 = vsyncpa %s17, 0
    %19 = vsyncpa [#allocation10], 0
    %s20 = scalar_lea.sflag [#allocation10], 1
    %21 = vsyncpa %s20, 0
    loop: start=0, step=1, limit=4
    $region2: #{tpu_custom_call.1} parent=1 // loop_pre_header
      _
    $region3: #{tpu_custom_call.1} parent=1 // loop_header
      %s23 = sphi 0, %s27
      %p24 = scmp.ge.s32.totalorder %s23, 4
      %s33 = sphi 0, %s35
      %s36 = sphi 0, %s33
      %s37 = sphi 0, %s36
      %s53 = sphi 0, %s37
      %s57 = sphi 0, %s57
      %s59 = sphi 0, %s57
      %s60 = sphi 0, %s59
      %s74 = sphi 0, %s60
      %s78 = sphi 0, %s78
      %s80 = sphi 0, %s78
      %s81 = sphi 0, %s80
      %s95 = sphi 0, %s81
      %s99 = sphi 0, %s99
      %s101 = sphi 0, %s99
      %s102 = sphi 0, %s101
      %s116 = sphi 0, %s102
      %s120 = sphi 0, %s120
      %s122 = sphi 0, %s120
      %s123 = sphi 0, %s122
      %s137 = sphi 0, %s123
      %s143 = sphi 0, %s145
      %s146 = sphi 0, %s143
      %s147 = sphi 0, %s146
      %s163 = sphi 0, %s147
      %s169 = sphi 0, %s171
      %s172 = sphi 0, %s169
      %s173 = sphi 0, %s172
      %s189 = sphi 0, %s173
    $region4: #{tpu_custom_call.1} parent=1 // loop_header_branch
      %26 = sbr.rel (%p24) target = $region8
    $region5: #{tpu_custom_call.1} parent=1 // loop_body
      %s28 = ssub.s32 %s23, 1
      %s29 = ssub.s32 %s23, 2
      %s30 = sadd.s32 %s23, 1
      %s31 = ssub.s32 %s23, %s30
      %p32 = scmp.eq.s32.totalorder %s31, 0
      %s34 = sadd.s32 %s33, 1
      %s35 = scalar_select %p32, %s33, %s34
      %p38 = pneg %p32
      %p39 = scmp.eq.s32.totalorder %s23, 1
      %p40 = por %p38, %p39
      %p41 = scmp.ne.s32.totalorder %s33, %s36
      %p42 = scmp.eq.s32.totalorder %s23, 0
      %p43 = por %p41, %p42
      %p44 = scmp.ne.s32.totalorder %s33, %s36
      %p45 = scmp.eq.s32.totalorder %s28, 1
      %p46 = por %p44, %p45
      %p47 = scmp.ne.s32.totalorder %s36, %s37
      %p48 = scmp.eq.s32.totalorder %s28, 0
      %p49 = por %p47, %p48
      %p50 = scmp.ne.s32.totalorder %s36, %s37
      %p51 = scmp.eq.s32.totalorder %s29, 1
      %p52 = por %p50, %p51
      %p54 = scmp.ne.s32.totalorder %s37, %s53
      %p55 = scmp.eq.s32.totalorder %s29, 0
      %p56 = por %p54, %p55
      %s58 = sadd.s32 %s57, 1
      %p61 = scmp.eq.s32.totalorder %s23, 1
      %p62 = scmp.ne.s32.totalorder %s57, %s59
      %p63 = scmp.eq.s32.totalorder %s23, 0
      %p64 = por %p62, %p63
      %p65 = scmp.ne.s32.totalorder %s57, %s59
      %p66 = scmp.eq.s32.totalorder %s28, 1
      %p67 = por %p65, %p66
      %p68 = scmp.ne.s32.totalorder %s59, %s60
      %p69 = scmp.eq.s32.totalorder %s28, 0
      %p70 = por %p68, %p69
      %p71 = scmp.ne.s32.totalorder %s59, %s60
      %p72 = scmp.eq.s32.totalorder %s29, 1
      %p73 = por %p71, %p72
      %p75 = scmp.ne.s32.totalorder %s60, %s74
      %p76 = scmp.eq.s32.totalorder %s29, 0
      %p77 = por %p75, %p76
      %s79 = sadd.s32 %s78, 1
      %p82 = scmp.eq.s32.totalorder %s23, 1
      %p83 = scmp.ne.s32.totalorder %s78, %s80
      %p84 = scmp.eq.s32.totalorder %s23, 0
      %p85 = por %p83, %p84
      %p86 = scmp.ne.s32.totalorder %s78, %s80
      %p87 = scmp.eq.s32.totalorder %s28, 1
      %p88 = por %p86, %p87
      %p89 = scmp.ne.s32.totalorder %s80, %s81
      %p90 = scmp.eq.s32.totalorder %s28, 0
      %p91 = por %p89, %p90
      %p92 = scmp.ne.s32.totalorder %s80, %s81
      %p93 = scmp.eq.s32.totalorder %s29, 1
      %p94 = por %p92, %p93
      %p96 = scmp.ne.s32.totalorder %s81, %s95
      %p97 = scmp.eq.s32.totalorder %s29, 0
      %p98 = por %p96, %p97
      %s100 = sadd.s32 %s99, 1
      %p103 = scmp.eq.s32.totalorder %s23, 1
      %p104 = scmp.ne.s32.totalorder %s99, %s101
      %p105 = scmp.eq.s32.totalorder %s23, 0
      %p106 = por %p104, %p105
      %p107 = scmp.ne.s32.totalorder %s99, %s101
      %p108 = scmp.eq.s32.totalorder %s28, 1
      %p109 = por %p107, %p108
      %p110 = scmp.ne.s32.totalorder %s101, %s102
      %p111 = scmp.eq.s32.totalorder %s28, 0
      %p112 = por %p110, %p111
      %p113 = scmp.ne.s32.totalorder %s101, %s102
      %p114 = scmp.eq.s32.totalorder %s29, 1
      %p115 = por %p113, %p114
      %p117 = scmp.ne.s32.totalorder %s102, %s116
      %p118 = scmp.eq.s32.totalorder %s29, 0
      %p119 = por %p117, %p118
      %s121 = sadd.s32 %s120, 1
      %p124 = scmp.eq.s32.totalorder %s23, 1
      %p125 = scmp.ne.s32.totalorder %s120, %s122
      %p126 = scmp.eq.s32.totalorder %s23, 0
      %p127 = por %p125, %p126
      %p128 = scmp.ne.s32.totalorder %s120, %s122
      %p129 = scmp.eq.s32.totalorder %s28, 1
      %p130 = por %p128, %p129
      %p131 = scmp.ne.s32.totalorder %s122, %s123
      %p132 = scmp.eq.s32.totalorder %s28, 0
      %p133 = por %p131, %p132
      %p134 = scmp.ne.s32.totalorder %s122, %s123
      %p135 = scmp.eq.s32.totalorder %s29, 1
      %p136 = por %p134, %p135
      %p138 = scmp.ne.s32.totalorder %s123, %s137
      %p139 = scmp.eq.s32.totalorder %s29, 0
      %p140 = por %p138, %p139
      %s141 = ssub.s32 %s23, %s30
      %p142 = scmp.eq.s32.totalorder %s141, 0
      %s144 = sadd.s32 %s143, 1
      %s145 = scalar_select %p142, %s143, %s144
      %p148 = pneg %p142
      %p149 = scmp.eq.s32.totalorder %s23, 1
      %p150 = por %p148, %p149
      %p151 = scmp.ne.s32.totalorder %s143, %s146
      %p152 = scmp.eq.s32.totalorder %s23, 0
      %p153 = por %p151, %p152
      %p154 = scmp.ne.s32.totalorder %s143, %s146
      %p155 = scmp.eq.s32.totalorder %s28, 1
      %p156 = por %p154, %p155
      %p157 = scmp.ne.s32.totalorder %s146, %s147
      %p158 = scmp.eq.s32.totalorder %s28, 0
      %p159 = por %p157, %p158
      %p160 = scmp.ne.s32.totalorder %s146, %s147
      %p161 = scmp.eq.s32.totalorder %s29, 1
      %p162 = por %p160, %p161
      %p164 = scmp.ne.s32.totalorder %s147, %s163
      %p165 = scmp.eq.s32.totalorder %s29, 0
      %p166 = por %p164, %p165
      %s167 = ssub.s32 %s23, %s30
      %p168 = scmp.eq.s32.totalorder %s167, 0
      %s170 = sadd.s32 %s169, 1
      %s171 = scalar_select %p168, %s169, %s170
      %p174 = pneg %p168
      %p175 = scmp.eq.s32.totalorder %s23, 1
      %p176 = por %p174, %p175
      %p177 = scmp.ne.s32.totalorder %s169, %s172
      %p178 = scmp.eq.s32.totalorder %s23, 0
      %p179 = por %p177, %p178
      %p180 = scmp.ne.s32.totalorder %s169, %s172
      %p181 = scmp.eq.s32.totalorder %s28, 1
      %p182 = por %p180, %p181
      %p183 = scmp.ne.s32.totalorder %s172, %s173
      %p184 = scmp.eq.s32.totalorder %s28, 0
      %p185 = por %p183, %p184
      %p186 = scmp.ne.s32.totalorder %s172, %s173
      %p187 = scmp.eq.s32.totalorder %s29, 1
      %p188 = por %p186, %p187
      %p190 = scmp.ne.s32.totalorder %s173, %s189
      %p191 = scmp.eq.s32.totalorder %s29, 0
      %p192 = por %p190, %p191
      %p193 = scmp.le.s32.totalorder 1, %s23
      %p194 = scmp.lt.s32.totalorder %s23, 3
      %p195 = pnand %p193, %p194
      %p196 = pneg %p195
      // Predicated region
      $region9: #{tpu_custom_call.1} parent=5 // pred_check
        _
      $region10: #{tpu_custom_call.1} parent=5 // pred_check_branch
        %198 = sbr.rel (%p195) target = $region12
      $region11: #{tpu_custom_call.1} parent=5 // pred_region
        %s199 = ssub.s32 %s23, 1
        // Predicated region
        $region13: #{tpu_custom_call.1} parent=11 // pred_check
          %p200 = pneg %p70
        $region14: #{tpu_custom_call.1} parent=11 // pred_check_branch
          %202 = sbr.rel (%p200) target = $region16
        $region15: #{tpu_custom_call.1} parent=11 // pred_region
          %s204 = ssub.s32 3072, 3072
          %205 = vsyncadd [#allocation6], %s204
          %s206 = sshll.u32 [#allocation5], 4
          %s207 = int_to_ptr.vmem [resolvable:$true] %s206
          %212 = dma.hbm_to_vmem [thread:$0]  %s1, 3072, %s207, [#allocation6], 128, 128, 8
        $region16: #{tpu_custom_call.1} parent=11 // pred_fallthru
          _
        // Predicated region
        $region17: #{tpu_custom_call.1} parent=11 // pred_check
          %p213 = pneg %p91
        $region18: #{tpu_custom_call.1} parent=11 // pred_check_branch
          %215 = sbr.rel (%p213) target = $region20
        $region19: #{tpu_custom_call.1} parent=11 // pred_region
          _
        $region20: #{tpu_custom_call.1} parent=11 // pred_fallthru
          _
        // Predicated region
        $region21: #{tpu_custom_call.1} parent=11 // pred_check
          %p216 = pneg %p112
        $region22: #{tpu_custom_call.1} parent=11 // pred_check_branch
          %218 = sbr.rel (%p216) target = $region24
        $region23: #{tpu_custom_call.1} parent=11 // pred_region
          %s220 = ssub.s32 6144, 6144
          %221 = vsyncadd [#allocation6], %s220
          %s222 = sshll.u32 [#allocation7], 4
          %s223 = int_to_ptr.vmem [resolvable:$true] %s222
          %228 = dma.hbm_to_vmem [thread:$0]  %s3, 6144, %s223, [#allocation6], 128, 128, 8
        $region24: #{tpu_custom_call.1} parent=11 // pred_fallthru
          _
        // Predicated region
        $region25: #{tpu_custom_call.1} parent=11 // pred_check
          %p229 = pneg %p133
        $region26: #{tpu_custom_call.1} parent=11 // pred_check_branch
          %231 = sbr.rel (%p229) target = $region28
        $region27: #{tpu_custom_call.1} parent=11 // pred_region
          _
        $region28: #{tpu_custom_call.1} parent=11 // pred_fallthru
          _
      $region12: #{tpu_custom_call.1} parent=5 // pred_fallthru
        _
      %p232 = scmp.lt.s32.totalorder %s23, 2
      // Predicated region
      $region29: #{tpu_custom_call.1} parent=5 // pred_check
        %p233 = pneg %p232
      $region30: #{tpu_custom_call.1} parent=5 // pred_check_branch
        %235 = sbr.rel (%p233) target = $region32
      $region31: #{tpu_custom_call.1} parent=5 // pred_region
        // Predicated region
        $region33: #{tpu_custom_call.1} parent=31 // pred_check
          %p236 = pneg %p43
        $region34: #{tpu_custom_call.1} parent=31 // pred_check_branch
          %238 = sbr.rel (%p236) target = $region36
        $region35: #{tpu_custom_call.1} parent=31 // pred_region
          %s239 = sand.u32 %s33, 1
          %s240 = scalar_lea.sflag [#allocation3], %s239
          %s241 = sand.u32 %s33, 1
          %s242 = smul.addr %s241, 16
          %s243 = scalar_lea.vmem [#allocation2], %s242
          %s245 = ssub.s32 256, 256
          %246 = vsyncadd %s240, %s245
          %s247 = smul.addr %s23, 2
          %s248 = smul.addr %s247, 128
          %s249 = scalar_lea.hbm %s0, %s248
          %s250 = sshll.u32 %s243, 4
          %s251 = int_to_ptr.vmem [resolvable:$true] %s250
          %256 = dma.hbm_to_vmem [thread:$0]  %s249, 256, %s251, %s240, 128, 128, 8
        $region36: #{tpu_custom_call.1} parent=31 // pred_fallthru
          _
      $region32: #{tpu_custom_call.1} parent=5 // pred_fallthru
        _
      %p257 = scmp.le.s32.totalorder 1, %s23
      %p258 = scmp.lt.s32.totalorder %s23, 3
      %p259 = pnand %p257, %p258
      %p260 = pneg %p259
      // Predicated region
      $region37: #{tpu_custom_call.1} parent=5 // pred_check
        _
      $region38: #{tpu_custom_call.1} parent=5 // pred_check_branch
        %262 = sbr.rel (%p259) target = $region40
      $region39: #{tpu_custom_call.1} parent=5 // pred_region
        %s263 = ssub.s32 %s23, 1
        %s264 = sand.u32 %s36, 1
        %s265 = scalar_lea.sflag [#allocation3], %s264
        %s266 = sand.u32 %s36, 1
        %s267 = smul.addr %s266, 16
        %s268 = scalar_lea.vmem [#allocation2], %s267
        // Predicated region
        $region41: #{tpu_custom_call.1} parent=39 // pred_check
          %p269 = pneg %p49
        $region42: #{tpu_custom_call.1} parent=39 // pred_check_branch
          %271 = sbr.rel (%p269) target = $region44
        $region43: #{tpu_custom_call.1} parent=39 // pred_region
          %272 = dma.done %s265, 256
        $region44: #{tpu_custom_call.1} parent=39 // pred_fallthru
          _
        // Predicated region
        $region45: #{tpu_custom_call.1} parent=39 // pred_check
          %p273 = pneg %p70
        $region46: #{tpu_custom_call.1} parent=39 // pred_check_branch
          %275 = sbr.rel (%p273) target = $region48
        $region47: #{tpu_custom_call.1} parent=39 // pred_region
          %276 = dma.done [#allocation6], 3072
        $region48: #{tpu_custom_call.1} parent=39 // pred_fallthru
          _
        // Predicated region
        $region49: #{tpu_custom_call.1} parent=39 // pred_check
          %p277 = pneg %p112
        $region50: #{tpu_custom_call.1} parent=39 // pred_check_branch
          %279 = sbr.rel (%p277) target = $region52
        $region51: #{tpu_custom_call.1} parent=39 // pred_region
          %280 = dma.done [#allocation6], 6144
        $region52: #{tpu_custom_call.1} parent=39 // pred_fallthru
          _
        %s281 = sand.u32 %s36, 1
        %s282 = scalar_lea.sflag [#allocation3], %s281
        %s283 = sand.u32 %s36, 1
        %s284 = smul.addr %s283, 16
        %s285 = scalar_lea.vmem [#allocation2], %s284
        %p286 = pneg %p49
        %p287 = pneg %p46
        %p288 = pneg %p70
        %p289 = pneg %p67
        %p290 = pneg %p91
        %p291 = pneg %p88
        %p292 = pneg %p112
        %p293 = pneg %p109
        %p294 = pneg %p133
        %p295 = pneg %p130
        %p296 = pneg %p159
        %p297 = pneg %p156
        %s298 = sand.u32 %s146, 1
        %s299 = scalar_lea.sflag [#allocation4], %s298
        %s300 = sand.u32 %s146, 1
        %s301 = smul.addr %s300, 16
        %s302 = scalar_lea.vmem [#allocation8], %s301
        %p303 = pneg %p185
        %p304 = pneg %p182
        %s305 = sand.u32 %s172, 1
        %s306 = scalar_lea.sflag [#allocation10], %s305
        %s307 = sand.u32 %s172, 1
        %s308 = smul.addr %s307, 16
        %s309 = scalar_lea.vmem [#allocation9], %s308
        %v310 = vlaneseq
        %v311 = vshrl.u32 %v310, 7
        %v312 = vadd.s32 %v311, 8
        %v313 = vlaneseq
        %v314 = vand.u32 %v313, 127
        %v315 = vadd.s32 %v314, 1
        %vm316 = vcmp.eq.s32.totalorder %v311, %v315
        %vm317 = vcmp.eq.s32.totalorder %v312, %v315
        %v318 = vsel %vm316, 1.0, 0.0
        %v319 = vsel %vm317, 1.0, 0.0
        %v320 = vadd.s32 %v311, 1
        %v321 = vadd.s32 %v312, 1
        %vm322 = vcmp.eq.s32.totalorder %v320, %v314
        %vm323 = vcmp.eq.s32.totalorder %v321, %v314
        %v324 = vsel %vm322, 1.0, 0.0
        %v325 = vsel %vm323, 1.0, 0.0
        %v326 = vld [vmem:[%s268] sm:$0xff]
        %v327 = vld [vmem:[%s268 + $0x8] sm:$0xff]
        %v328 = vld [vmem:[%s2] sm:$0x1]
        %vm329 = vcmask 130048
        %v331 = vsel %vm329, %v318, 0
        %v334 = vsel %vm329, %v319, 0
        %336 = vmatprep.subr.mxu0 0.0
        %337 = vmatpush1.msra.mxu0 %v326
        %338 = vmatprep.subr.mxu0 0.0
        %339 = vmatpush1.msra.mxu0 %v327
        %340 = vmatprep.subr.mxu0 0.0
        %341 = vmatpush1.msra.mxu0 0.0
        %342 = vmatprep.subr.mxu0 0.0
        %343 = vmatpush1.msra.mxu0 0.0
        %344 = vmatprep.subr.mxu0 0.0
        %345 = vmatpush1.msra.mxu0 0.0
        %346 = vmatprep.subr.mxu0 0.0
        %347 = vmatpush1.msra.mxu0 0.0
        %348 = vmatprep.subr.mxu0 0.0
        %349 = vmatpush1.msra.mxu0 0.0
        %350 = vmatprep.subr.mxu0 0.0
        %351 = vmatpush1.msra.mxu0 0.0
        %352 = vmatprep.subr.mxu0 0.0
        %353 = vmatpush1.msra.mxu0 0.0
        %354 = vmatprep.subr.mxu0 0.0
        %355 = vmatpush1.msra.mxu0 0.0
        %356 = vmatprep.subr.mxu0 0.0
        %357 = vmatpush1.msra.mxu0 0.0
        %358 = vmatprep.subr.mxu0 0.0
        %359 = vmatpush1.msra.mxu0 0.0
        %360 = vmatprep.subr.mxu0 0.0
        %361 = vmatpush1.msra.mxu0 0.0
        %362 = vmatprep.subr.mxu0 0.0
        %363 = vmatpush1.msra.mxu0 0.0
        %364 = vmatprep.subr.mxu0 0.0
        %365 = vmatpush1.msra.mxu0 0.0
        %366 = vmatprep.subr.mxu0 0.0
        %367 = vmatpush1.msra.mxu0 0.0
        %368 = vmatprep.subr.mxu0 0.0
        %369 = vmatpush1.msra.mxu0 0.0
        %370 = vmatprep.subr.mxu0 0.0
        %371 = vmatpush1.msra.mxu0 0.0
        %372 = vmatprep.subr.mxu0 0.0
        %373 = vmatpush1.msra.mxu0 0.0
        %374 = vmatprep.subr.mxu0 0.0
        %375 = vmatpush1.msra.mxu0 0.0
        %376 = vmatprep.subr.mxu0 0.0
        %377 = vmatpush1.msra.mxu0 0.0
        %378 = vmatprep.subr.mxu0 0.0
        %379 = vmatpush1.msra.mxu0 0.0
        %380 = vmatprep.subr.mxu0 0.0
        %381 = vmatpush1.msra.mxu0 0.0
        %382 = vmatprep.subr.mxu0 0.0
        %383 = vmatpush1.msra.mxu0 0.0
        %384 = vmatprep.subr.mxu0 0.0
        %385 = vmatpush1.msra.mxu0 0.0
        %386 = vmatprep.subr.mxu0 0.0
        %387 = vmatpush1.msra.mxu0 0.0
        %388 = vmatprep.subr.mxu0 0.0
        %389 = vmatpush1.msra.mxu0 0.0
        %390 = vmatprep.subr.mxu0 0.0
        %391 = vmatpush1.msra.mxu0 0.0
        %392 = vmatprep.subr.mxu0 0.0
        %393 = vmatpush1.msra.mxu0 0.0
        %394 = vmatprep.subr.mxu0 0.0
        %395 = vmatpush1.msra.mxu0 0.0
        %396 = vmatprep.subr.mxu0 0.0
        %397 = vmatpush1.msra.mxu0 0.0
        %398 = vmatprep.subr.mxu0 0.0
        %399 = vmatpush1.msra.mxu0 0.0
        %400 = vmatprep.mubr.f32.mxu0 0.0
        %401 = vmatmul.mubr.f32.gmra.mrb[0].mxu0 %v331
        %v402 = vpop.f32.mrb[0].mxu0
        %v403 = vadd.f32 0.0, %v402
        %v404 = vpop.f32.mrb[0].mxu0
        %405 = vmatprep.mubr.f32.mxu0 0.0
        %406 = vmatmul.mubr.f32.gmra.mrb[0].mxu0 %v334
        %v407 = vpop.f32.mrb[0].mxu0
        %v408 = vadd.f32 0.0, %v407
        %v409 = vpop.f32.mrb[0].mxu0
        %410 = vdwg.mxu0
        %v412 = vsel %vm329, %v324, 0
        %v415 = vsel %vm329, %v325, 0
        %417 = vmatprep.subr.mxu0 0.0
        %418 = vmatpush1.msra.mxu0 %v326
        %419 = vmatprep.subr.mxu0 0.0
        %420 = vmatpush1.msra.mxu0 %v327
        %421 = vmatprep.subr.mxu0 0.0
        %422 = vmatpush1.msra.mxu0 0.0
        %423 = vmatprep.subr.mxu0 0.0
        %424 = vmatpush1.msra.mxu0 0.0
        %425 = vmatprep.subr.mxu0 0.0
        %426 = vmatpush1.msra.mxu0 0.0
        %427 = vmatprep.subr.mxu0 0.0
        %428 = vmatpush1.msra.mxu0 0.0
        %429 = vmatprep.subr.mxu0 0.0
        %430 = vmatpush1.msra.mxu0 0.0
        %431 = vmatprep.subr.mxu0 0.0
        %432 = vmatpush1.msra.mxu0 0.0
        %433 = vmatprep.subr.mxu0 0.0
        %434 = vmatpush1.msra.mxu0 0.0
        %435 = vmatprep.subr.mxu0 0.0
        %436 = vmatpush1.msra.mxu0 0.0
        %437 = vmatprep.subr.mxu0 0.0
        %438 = vmatpush1.msra.mxu0 0.0
        %439 = vmatprep.subr.mxu0 0.0
        %440 = vmatpush1.msra.mxu0 0.0
        %441 = vmatprep.subr.mxu0 0.0
        %442 = vmatpush1.msra.mxu0 0.0
        %443 = vmatprep.subr.mxu0 0.0
        %444 = vmatpush1.msra.mxu0 0.0
        %445 = vmatprep.subr.mxu0 0.0
        %446 = vmatpush1.msra.mxu0 0.0
        %447 = vmatprep.subr.mxu0 0.0
        %448 = vmatpush1.msra.mxu0 0.0
        %449 = vmatprep.subr.mxu0 0.0
        %450 = vmatpush1.msra.mxu0 0.0
        %451 = vmatprep.subr.mxu0 0.0
        %452 = vmatpush1.msra.mxu0 0.0
        %453 = vmatprep.subr.mxu0 0.0
        %454 = vmatpush1.msra.mxu0 0.0
        %455 = vmatprep.subr.mxu0 0.0
        %456 = vmatpush1.msra.mxu0 0.0
        %457 = vmatprep.subr.mxu0 0.0
        %458 = vmatpush1.msra.mxu0 0.0
        %459 = vmatprep.subr.mxu0 0.0
        %460 = vmatpush1.msra.mxu0 0.0
        %461 = vmatprep.subr.mxu0 0.0
        %462 = vmatpush1.msra.mxu0 0.0
        %463 = vmatprep.subr.mxu0 0.0
        %464 = vmatpush1.msra.mxu0 0.0
        %465 = vmatprep.subr.mxu0 0.0
        %466 = vmatpush1.msra.mxu0 0.0
        %467 = vmatprep.subr.mxu0 0.0
        %468 = vmatpush1.msra.mxu0 0.0
        %469 = vmatprep.subr.mxu0 0.0
        %470 = vmatpush1.msra.mxu0 0.0
        %471 = vmatprep.subr.mxu0 0.0
        %472 = vmatpush1.msra.mxu0 0.0
        %473 = vmatprep.subr.mxu0 0.0
        %474 = vmatpush1.msra.mxu0 0.0
        %475 = vmatprep.subr.mxu0 0.0
        %476 = vmatpush1.msra.mxu0 0.0
        %477 = vmatprep.subr.mxu0 0.0
        %478 = vmatpush1.msra.mxu0 0.0
        %479 = vmatprep.subr.mxu0 0.0
        %480 = vmatpush1.msra.mxu0 0.0
        %481 = vmatprep.mubr.f32.mxu0 0.0
        %482 = vmatmul.mubr.f32.gmra.mrb[0].mxu0 %v412
        %v483 = vpop.f32.mrb[0].mxu0
        %v484 = vadd.f32 0.0, %v483
        %v485 = vpop.f32.mrb[0].mxu0
        %486 = vmatprep.mubr.f32.mxu0 0.0
        %487 = vmatmul.mubr.f32.gmra.mrb[0].mxu0 %v415
        %v488 = vpop.f32.mrb[0].mxu0
        %v489 = vadd.f32 0.0, %v488
        %v490 = vpop.f32.mrb[0].mxu0
        %491 = vdwg.mxu0
        %v492 = vld [vmem:[#allocation5] sm:$0xff]
        %v493 = vld [vmem:[#allocation5 + $0x8] sm:$0xff]
        %v494 = vld [vmem:[#allocation5 + $0x10] sm:$0xff]
        %v495 = vld [vmem:[#allocation5 + $0x18] sm:$0xff]
        %v496 = vld [vmem:[#allocation5 + $0x20] sm:$0xff]
        %v497 = vld [vmem:[#allocation5 + $0x28] sm:$0xff]
        %v498 = vld [vmem:[#allocation5 + $0x30] sm:$0xff]
        %v499 = vld [vmem:[#allocation5 + $0x38] sm:$0xff]
        %vm500 = vcmask 523264
        %v502 = vsel %vm500, %v403, 0
        %v505 = vsel %vm500, %v408, 0
        %507 = vmatprep.subr.mxu0 0.0
        %508 = vmatpush1.msra.mxu0 %v492
        %509 = vmatprep.subr.mxu0 0.0
        %510 = vmatpush1.msra.mxu0 %v493
        %511 = vmatprep.subr.mxu0 0.0
        %512 = vmatpush1.msra.mxu0 %v494
        %513 = vmatprep.subr.mxu0 0.0
        %514 = vmatpush1.msra.mxu0 %v495
        %515 = vmatprep.subr.mxu0 0.0
        %516 = vmatpush1.msra.mxu0 %v496
        %517 = vmatprep.subr.mxu0 0.0
        %518 = vmatpush1.msra.mxu0 %v497
        %519 = vmatprep.subr.mxu0 0.0
        %520 = vmatpush1.msra.mxu0 %v498
        %521 = vmatprep.subr.mxu0 0.0
        %522 = vmatpush1.msra.mxu0 %v499
        %523 = vmatprep.subr.mxu0 0.0
        %524 = vmatpush1.msra.mxu0 0.0
        %525 = vmatprep.subr.mxu0 0.0
        %526 = vmatpush1.msra.mxu0 0.0
        %527 = vmatprep.subr.mxu0 0.0
        %528 = vmatpush1.msra.mxu0 0.0
        %529 = vmatprep.subr.mxu0 0.0
        %530 = vmatpush1.msra.mxu0 0.0
        %531 = vmatprep.subr.mxu0 0.0
        %532 = vmatpush1.msra.mxu0 0.0
        %533 = vmatprep.subr.mxu0 0.0
        %534 = vmatpush1.msra.mxu0 0.0
        %535 = vmatprep.subr.mxu0 0.0
        %536 = vmatpush1.msra.mxu0 0.0
        %537 = vmatprep.subr.mxu0 0.0
        %538 = vmatpush1.msra.mxu0 0.0
        %539 = vmatprep.subr.mxu0 0.0
        %540 = vmatpush1.msra.mxu0 0.0
        %541 = vmatprep.subr.mxu0 0.0
        %542 = vmatpush1.msra.mxu0 0.0
        %543 = vmatprep.subr.mxu0 0.0
        %544 = vmatpush1.msra.mxu0 0.0
        %545 = vmatprep.subr.mxu0 0.0
        %546 = vmatpush1.msra.mxu0 0.0
        %547 = vmatprep.subr.mxu0 0.0
        %548 = vmatpush1.msra.mxu0 0.0
        %549 = vmatprep.subr.mxu0 0.0
        %550 = vmatpush1.msra.mxu0 0.0
        %551 = vmatprep.subr.mxu0 0.0
        %552 = vmatpush1.msra.mxu0 0.0
        %553 = vmatprep.subr.mxu0 0.0
        %554 = vmatpush1.msra.mxu0 0.0
        %555 = vmatprep.subr.mxu0 0.0
        %556 = vmatpush1.msra.mxu0 0.0
        %557 = vmatprep.subr.mxu0 0.0
        %558 = vmatpush1.msra.mxu0 0.0
        %559 = vmatprep.subr.mxu0 0.0
        %560 = vmatpush1.msra.mxu0 0.0
        %561 = vmatprep.subr.mxu0 0.0
        %562 = vmatpush1.msra.mxu0 0.0
        %563 = vmatprep.subr.mxu0 0.0
        %564 = vmatpush1.msra.mxu0 0.0
        %565 = vmatprep.subr.mxu0 0.0
        %566 = vmatpush1.msra.mxu0 0.0
        %567 = vmatprep.subr.mxu0 0.0
        %568 = vmatpush1.msra.mxu0 0.0
        %569 = vmatprep.subr.mxu0 0.0
        %570 = vmatpush1.msra.mxu0 0.0
        %571 = vmatprep.mubr.f32.mxu0 0.0
        %572 = vmatmul.mubr.f32.gmra.mrb[0].mxu0 %v502
        %v573 = vpop.f32.mrb[0].mxu0
        %v574 = vadd.f32 0.0, %v573
        %v575 = vpop.f32.mrb[0].mxu0
        %576 = vmatprep.mubr.f32.mxu0 0.0
        %577 = vmatmul.mubr.f32.gmra.mrb[0].mxu0 %v505
        %v578 = vpop.f32.mrb[0].mxu0
        %v579 = vadd.f32 0.0, %v578
        %v580 = vpop.f32.mrb[0].mxu0
        %581 = vdwg.mxu0
        %v583 = vlaneseq
        %v584 = vshrl.u32 %v583, 7
        %v585 = vsub.s32 0, %v584
        %v586 = vrot.slane %v328, %v585
        %v588 = vadd.f32 %v586, %v574
        %v589 = vadd.f32 %v586, %v579
        %v590 = vld [vmem:[#allocation5 + $0x40] sm:$0xff]
        %v591 = vld [vmem:[#allocation5 + $0x48] sm:$0xff]
        %v592 = vld [vmem:[#allocation5 + $0x50] sm:$0xff]
        %v593 = vld [vmem:[#allocation5 + $0x58] sm:$0xff]
        %v594 = vld [vmem:[#allocation5 + $0x60] sm:$0xff]
        %v595 = vld [vmem:[#allocation5 + $0x68] sm:$0xff]
        %v596 = vld [vmem:[#allocation5 + $0x70] sm:$0xff]
        %v597 = vld [vmem:[#allocation5 + $0x78] sm:$0xff]
        %v599 = vsel %vm500, %v326, 0
        %v602 = vsel %vm500, %v327, 0
        %604 = vmatprep.subr.mxu0 0.0
        %605 = vmatpush1.msra.mxu0 %v590
        %606 = vmatprep.subr.mxu0 0.0
        %607 = vmatpush1.msra.mxu0 %v591
        %608 = vmatprep.subr.mxu0 0.0
        %609 = vmatpush1.msra.mxu0 %v592
        %610 = vmatprep.subr.mxu0 0.0
        %611 = vmatpush1.msra.mxu0 %v593
        %612 = vmatprep.subr.mxu0 0.0
        %613 = vmatpush1.msra.mxu0 %v594
        %614 = vmatprep.subr.mxu0 0.0
        %615 = vmatpush1.msra.mxu0 %v595
        %616 = vmatprep.subr.mxu0 0.0
        %617 = vmatpush1.msra.mxu0 %v596
        %618 = vmatprep.subr.mxu0 0.0
        %619 = vmatpush1.msra.mxu0 %v597
        %620 = vmatprep.subr.mxu0 0.0
        %621 = vmatpush1.msra.mxu0 0.0
        %622 = vmatprep.subr.mxu0 0.0
        %623 = vmatpush1.msra.mxu0 0.0
        %624 = vmatprep.subr.mxu0 0.0
        %625 = vmatpush1.msra.mxu0 0.0
        %626 = vmatprep.subr.mxu0 0.0
        %627 = vmatpush1.msra.mxu0 0.0
        %628 = vmatprep.subr.mxu0 0.0
        %629 = vmatpush1.msra.mxu0 0.0
        %630 = vmatprep.subr.mxu0 0.0
        %631 = vmatpush1.msra.mxu0 0.0
        %632 = vmatprep.subr.mxu0 0.0
        %633 = vmatpush1.msra.mxu0 0.0
        %634 = vmatprep.subr.mxu0 0.0
        %635 = vmatpush1.msra.mxu0 0.0
        %636 = vmatprep.subr.mxu0 0.0
        %637 = vmatpush1.msra.mxu0 0.0
        %638 = vmatprep.subr.mxu0 0.0
        %639 = vmatpush1.msra.mxu0 0.0
        %640 = vmatprep.subr.mxu0 0.0
        %641 = vmatpush1.msra.mxu0 0.0
        %642 = vmatprep.subr.mxu0 0.0
        %643 = vmatpush1.msra.mxu0 0.0
        %644 = vmatprep.subr.mxu0 0.0
        %645 = vmatpush1.msra.mxu0 0.0
        %646 = vmatprep.subr.mxu0 0.0
        %647 = vmatpush1.msra.mxu0 0.0
        %648 = vmatprep.subr.mxu0 0.0
        %649 = vmatpush1.msra.mxu0 0.0
        %650 = vmatprep.subr.mxu0 0.0
        %651 = vmatpush1.msra.mxu0 0.0
        %652 = vmatprep.subr.mxu0 0.0
        %653 = vmatpush1.msra.mxu0 0.0
        %654 = vmatprep.subr.mxu0 0.0
        %655 = vmatpush1.msra.mxu0 0.0
        %656 = vmatprep.subr.mxu0 0.0
        %657 = vmatpush1.msra.mxu0 0.0
        %658 = vmatprep.subr.mxu0 0.0
        %659 = vmatpush1.msra.mxu0 0.0
        %660 = vmatprep.subr.mxu0 0.0
        %661 = vmatpush1.msra.mxu0 0.0
        %662 = vmatprep.subr.mxu0 0.0
        %663 = vmatpush1.msra.mxu0 0.0
        %664 = vmatprep.subr.mxu0 0.0
        %665 = vmatpush1.msra.mxu0 0.0
        %666 = vmatprep.subr.mxu0 0.0
        %667 = vmatpush1.msra.mxu0 0.0
        %668 = vmatprep.mubr.f32.mxu0 0.0
        %669 = vmatmul.mubr.f32.gmra.mrb[0].mxu0 %v599
        %v670 = vpop.f32.mrb[0].mxu0
        %v671 = vadd.f32 0.0, %v670
        %v672 = vpop.f32.mrb[0].mxu0
        %673 = vmatprep.mubr.f32.mxu0 0.0
        %674 = vmatmul.mubr.f32.gmra.mrb[0].mxu0 %v602
        %v675 = vpop.f32.mrb[0].mxu0
        %v676 = vadd.f32 0.0, %v675
        %v677 = vpop.f32.mrb[0].mxu0
        %678 = vdwg.mxu0
        %v679 = vadd.f32 %v588, %v671
        %v680 = vadd.f32 %v589, %v676
        %v681 = vld [vmem:[#allocation5 + $0x80] sm:$0xff]
        %v682 = vld [vmem:[#allocation5 + $0x88] sm:$0xff]
        %v683 = vld [vmem:[#allocation5 + $0x90] sm:$0xff]
        %v684 = vld [vmem:[#allocation5 + $0x98] sm:$0xff]
        %v685 = vld [vmem:[#allocation5 + $0xa0] sm:$0xff]
        %v686 = vld [vmem:[#allocation5 + $0xa8] sm:$0xff]
        %v687 = vld [vmem:[#allocation5 + $0xb0] sm:$0xff]
        %v688 = vld [vmem:[#allocation5 + $0xb8] sm:$0xff]
        %v690 = vsel %vm500, %v484, 0
        %v693 = vsel %vm500, %v489, 0
        %695 = vmatprep.subr.mxu0 0.0
        %696 = vmatpush1.msra.mxu0 %v681
        %697 = vmatprep.subr.mxu0 0.0
        %698 = vmatpush1.msra.mxu0 %v682
        %699 = vmatprep.subr.mxu0 0.0
        %700 = vmatpush1.msra.mxu0 %v683
        %701 = vmatprep.subr.mxu0 0.0
        %702 = vmatpush1.msra.mxu0 %v684
        %703 = vmatprep.subr.mxu0 0.0
        %704 = vmatpush1.msra.mxu0 %v685
        %705 = vmatprep.subr.mxu0 0.0
        %706 = vmatpush1.msra.mxu0 %v686
        %707 = vmatprep.subr.mxu0 0.0
        %708 = vmatpush1.msra.mxu0 %v687
        %709 = vmatprep.subr.mxu0 0.0
        %710 = vmatpush1.msra.mxu0 %v688
        %711 = vmatprep.subr.mxu0 0.0
        %712 = vmatpush1.msra.mxu0 0.0
        %713 = vmatprep.subr.mxu0 0.0
        %714 = vmatpush1.msra.mxu0 0.0
        %715 = vmatprep.subr.mxu0 0.0
        %716 = vmatpush1.msra.mxu0 0.0
        %717 = vmatprep.subr.mxu0 0.0
        %718 = vmatpush1.msra.mxu0 0.0
        %719 = vmatprep.subr.mxu0 0.0
        %720 = vmatpush1.msra.mxu0 0.0
        %721 = vmatprep.subr.mxu0 0.0
        %722 = vmatpush1.msra.mxu0 0.0
        %723 = vmatprep.subr.mxu0 0.0
        %724 = vmatpush1.msra.mxu0 0.0
        %725 = vmatprep.subr.mxu0 0.0
        %726 = vmatpush1.msra.mxu0 0.0
        %727 = vmatprep.subr.mxu0 0.0
        %728 = vmatpush1.msra.mxu0 0.0
        %729 = vmatprep.subr.mxu0 0.0
        %730 = vmatpush1.msra.mxu0 0.0
        %731 = vmatprep.subr.mxu0 0.0
        %732 = vmatpush1.msra.mxu0 0.0
        %733 = vmatprep.subr.mxu0 0.0
        %734 = vmatpush1.msra.mxu0 0.0
        %735 = vmatprep.subr.mxu0 0.0
        %736 = vmatpush1.msra.mxu0 0.0
        %737 = vmatprep.subr.mxu0 0.0
        %738 = vmatpush1.msra.mxu0 0.0
        %739 = vmatprep.subr.mxu0 0.0
        %740 = vmatpush1.msra.mxu0 0.0
        %741 = vmatprep.subr.mxu0 0.0
        %742 = vmatpush1.msra.mxu0 0.0
        %743 = vmatprep.subr.mxu0 0.0
        %744 = vmatpush1.msra.mxu0 0.0
        %745 = vmatprep.subr.mxu0 0.0
        %746 = vmatpush1.msra.mxu0 0.0
        %747 = vmatprep.subr.mxu0 0.0
        %748 = vmatpush1.msra.mxu0 0.0
        %749 = vmatprep.subr.mxu0 0.0
        %750 = vmatpush1.msra.mxu0 0.0
        %751 = vmatprep.subr.mxu0 0.0
        %752 = vmatpush1.msra.mxu0 0.0
        %753 = vmatprep.subr.mxu0 0.0
        %754 = vmatpush1.msra.mxu0 0.0
        %755 = vmatprep.subr.mxu0 0.0
        %756 = vmatpush1.msra.mxu0 0.0
        %757 = vmatprep.subr.mxu0 0.0
        %758 = vmatpush1.msra.mxu0 0.0
        %759 = vmatprep.mubr.f32.mxu0 0.0
        %760 = vmatmul.mubr.f32.gmra.mrb[0].mxu0 %v690
        %v761 = vpop.f32.mrb[0].mxu0
        %v762 = vadd.f32 0.0, %v761
        %v763 = vpop.f32.mrb[0].mxu0
        %764 = vmatprep.mubr.f32.mxu0 0.0
        %765 = vmatmul.mubr.f32.gmra.mrb[0].mxu0 %v693
        %v766 = vpop.f32.mrb[0].mxu0
        %v767 = vadd.f32 0.0, %v766
        %v768 = vpop.f32.mrb[0].mxu0
        %769 = vdwg.mxu0
        %v770 = vadd.f32 %v679, %v762
        %v771 = vadd.f32 %v680, %v767
        %772 = vst [vmem:[%s302] sm:$0xff] %v770
        %773 = vst [vmem:[%s302 + $0x8] sm:$0xff] %v771
        %v774 = vmax.f32 %v770, 0.0
        %v775 = vmax.f32 %v771, 0.0
        %v776 = vld [vmem:[%s4] sm:$0x1]
        %777 = vmatprep.subr.mxu0 0.0
        %778 = vmatpush1.msra.mxu0 %v774
        %779 = vmatprep.subr.mxu0 0.0
        %780 = vmatpush1.msra.mxu0 %v775
        %781 = vmatprep.subr.mxu0 0.0
        %782 = vmatpush1.msra.mxu0 0.0
        %783 = vmatprep.subr.mxu0 0.0
        %784 = vmatpush1.msra.mxu0 0.0
        %785 = vmatprep.subr.mxu0 0.0
        %786 = vmatpush1.msra.mxu0 0.0
        %787 = vmatprep.subr.mxu0 0.0
        %788 = vmatpush1.msra.mxu0 0.0
        %789 = vmatprep.subr.mxu0 0.0
        %790 = vmatpush1.msra.mxu0 0.0
        %791 = vmatprep.subr.mxu0 0.0
        %792 = vmatpush1.msra.mxu0 0.0
        %793 = vmatprep.subr.mxu0 0.0
        %794 = vmatpush1.msra.mxu0 0.0
        %795 = vmatprep.subr.mxu0 0.0
        %796 = vmatpush1.msra.mxu0 0.0
        %797 = vmatprep.subr.mxu0 0.0
        %798 = vmatpush1.msra.mxu0 0.0
        %799 = vmatprep.subr.mxu0 0.0
        %800 = vmatpush1.msra.mxu0 0.0
        %801 = vmatprep.subr.mxu0 0.0
        %802 = vmatpush1.msra.mxu0 0.0
        %803 = vmatprep.subr.mxu0 0.0
        %804 = vmatpush1.msra.mxu0 0.0
        %805 = vmatprep.subr.mxu0 0.0
        %806 = vmatpush1.msra.mxu0 0.0
        %807 = vmatprep.subr.mxu0 0.0
        %808 = vmatpush1.msra.mxu0 0.0
        %809 = vmatprep.subr.mxu0 0.0
        %810 = vmatpush1.msra.mxu0 0.0
        %811 = vmatprep.subr.mxu0 0.0
        %812 = vmatpush1.msra.mxu0 0.0
        %813 = vmatprep.subr.mxu0 0.0
        %814 = vmatpush1.msra.mxu0 0.0
        %815 = vmatprep.subr.mxu0 0.0
        %816 = vmatpush1.msra.mxu0 0.0
        %817 = vmatprep.subr.mxu0 0.0
        %818 = vmatpush1.msra.mxu0 0.0
        %819 = vmatprep.subr.mxu0 0.0
        %820 = vmatpush1.msra.mxu0 0.0
        %821 = vmatprep.subr.mxu0 0.0
        %822 = vmatpush1.msra.mxu0 0.0
        %823 = vmatprep.subr.mxu0 0.0
        %824 = vmatpush1.msra.mxu0 0.0
        %825 = vmatprep.subr.mxu0 0.0
        %826 = vmatpush1.msra.mxu0 0.0
        %827 = vmatprep.subr.mxu0 0.0
        %828 = vmatpush1.msra.mxu0 0.0
        %829 = vmatprep.subr.mxu0 0.0
        %830 = vmatpush1.msra.mxu0 0.0
        %831 = vmatprep.subr.mxu0 0.0
        %832 = vmatpush1.msra.mxu0 0.0
        %833 = vmatprep.subr.mxu0 0.0
        %834 = vmatpush1.msra.mxu0 0.0
        %835 = vmatprep.subr.mxu0 0.0
        %836 = vmatpush1.msra.mxu0 0.0
        %837 = vmatprep.subr.mxu0 0.0
        %838 = vmatpush1.msra.mxu0 0.0
        %839 = vmatprep.subr.mxu0 0.0
        %840 = vmatpush1.msra.mxu0 0.0
        %841 = vmatprep.mubr.f32.mxu0 0.0
        %842 = vmatmul.mubr.f32.gmra.mrb[0].mxu0 %v331
        %v843 = vpop.f32.mrb[0].mxu0
        %v844 = vadd.f32 0.0, %v843
        %v845 = vpop.f32.mrb[0].mxu0
        %846 = vmatprep.mubr.f32.mxu0 0.0
        %847 = vmatmul.mubr.f32.gmra.mrb[0].mxu0 %v334
        %v848 = vpop.f32.mrb[0].mxu0
        %v849 = vadd.f32 0.0, %v848
        %v850 = vpop.f32.mrb[0].mxu0
        %851 = vdwg.mxu0
        %852 = vmatprep.subr.mxu0 0.0
        %853 = vmatpush1.msra.mxu0 %v774
        %854 = vmatprep.subr.mxu0 0.0
        %855 = vmatpush1.msra.mxu0 %v775
        %856 = vmatprep.subr.mxu0 0.0
        %857 = vmatpush1.msra.mxu0 0.0
        %858 = vmatprep.subr.mxu0 0.0
        %859 = vmatpush1.msra.mxu0 0.0
        %860 = vmatprep.subr.mxu0 0.0
        %861 = vmatpush1.msra.mxu0 0.0
        %862 = vmatprep.subr.mxu0 0.0
        %863 = vmatpush1.msra.mxu0 0.0
        %864 = vmatprep.subr.mxu0 0.0
        %865 = vmatpush1.msra.mxu0 0.0
        %866 = vmatprep.subr.mxu0 0.0
        %867 = vmatpush1.msra.mxu0 0.0
        %868 = vmatprep.subr.mxu0 0.0
        %869 = vmatpush1.msra.mxu0 0.0
        %870 = vmatprep.subr.mxu0 0.0
        %871 = vmatpush1.msra.mxu0 0.0
        %872 = vmatprep.subr.mxu0 0.0
        %873 = vmatpush1.msra.mxu0 0.0
        %874 = vmatprep.subr.mxu0 0.0
        %875 = vmatpush1.msra.mxu0 0.0
        %876 = vmatprep.subr.mxu0 0.0
        %877 = vmatpush1.msra.mxu0 0.0
        %878 = vmatprep.subr.mxu0 0.0
        %879 = vmatpush1.msra.mxu0 0.0
        %880 = vmatprep.subr.mxu0 0.0
        %881 = vmatpush1.msra.mxu0 0.0
        %882 = vmatprep.subr.mxu0 0.0
        %883 = vmatpush1.msra.mxu0 0.0
        %884 = vmatprep.subr.mxu0 0.0
        %885 = vmatpush1.msra.mxu0 0.0
        %886 = vmatprep.subr.mxu0 0.0
        %887 = vmatpush1.msra.mxu0 0.0
        %888 = vmatprep.subr.mxu0 0.0
        %889 = vmatpush1.msra.mxu0 0.0
        %890 = vmatprep.subr.mxu0 0.0
        %891 = vmatpush1.msra.mxu0 0.0
        %892 = vmatprep.subr.mxu0 0.0
        %893 = vmatpush1.msra.mxu0 0.0
        %894 = vmatprep.subr.mxu0 0.0
        %895 = vmatpush1.msra.mxu0 0.0
        %896 = vmatprep.subr.mxu0 0.0
        %897 = vmatpush1.msra.mxu0 0.0
        %898 = vmatprep.subr.mxu0 0.0
        %899 = vmatpush1.msra.mxu0 0.0
        %900 = vmatprep.subr.mxu0 0.0
        %901 = vmatpush1.msra.mxu0 0.0
        %902 = vmatprep.subr.mxu0 0.0
        %903 = vmatpush1.msra.mxu0 0.0
        %904 = vmatprep.subr.mxu0 0.0
        %905 = vmatpush1.msra.mxu0 0.0
        %906 = vmatprep.subr.mxu0 0.0
        %907 = vmatpush1.msra.mxu0 0.0
        %908 = vmatprep.subr.mxu0 0.0
        %909 = vmatpush1.msra.mxu0 0.0
        %910 = vmatprep.subr.mxu0 0.0
        %911 = vmatpush1.msra.mxu0 0.0
        %912 = vmatprep.subr.mxu0 0.0
        %913 = vmatpush1.msra.mxu0 0.0
        %914 = vmatprep.subr.mxu0 0.0
        %915 = vmatpush1.msra.mxu0 0.0
        %916 = vmatprep.mubr.f32.mxu0 0.0
        %917 = vmatmul.mubr.f32.gmra.mrb[0].mxu0 %v412
        %v918 = vpop.f32.mrb[0].mxu0
        %v919 = vadd.f32 0.0, %v918
        %v920 = vpop.f32.mrb[0].mxu0
        %921 = vmatprep.mubr.f32.mxu0 0.0
        %922 = vmatmul.mubr.f32.gmra.mrb[0].mxu0 %v415
        %v923 = vpop.f32.mrb[0].mxu0
        %v924 = vadd.f32 0.0, %v923
        %v925 = vpop.f32.mrb[0].mxu0
        %926 = vdwg.mxu0
        %v927 = vld [vmem:[#allocation7] sm:$0xff]
        %v928 = vld [vmem:[#allocation7 + $0x8] sm:$0xff]
        %v929 = vld [vmem:[#allocation7 + $0x10] sm:$0xff]
        %v930 = vld [vmem:[#allocation7 + $0x18] sm:$0xff]
        %v931 = vld [vmem:[#allocation7 + $0x20] sm:$0xff]
        %v932 = vld [vmem:[#allocation7 + $0x28] sm:$0xff]
        %v933 = vld [vmem:[#allocation7 + $0x30] sm:$0xff]
        %v934 = vld [vmem:[#allocation7 + $0x38] sm:$0xff]
        %v935 = vld [vmem:[#allocation7 + $0x40] sm:$0xff]
        %v936 = vld [vmem:[#allocation7 + $0x48] sm:$0xff]
        %v937 = vld [vmem:[#allocation7 + $0x50] sm:$0xff]
        %v938 = vld [vmem:[#allocation7 + $0x58] sm:$0xff]
        %v939 = vld [vmem:[#allocation7 + $0x60] sm:$0xff]
        %v940 = vld [vmem:[#allocation7 + $0x68] sm:$0xff]
        %v941 = vld [vmem:[#allocation7 + $0x70] sm:$0xff]
        %v942 = vld [vmem:[#allocation7 + $0x78] sm:$0xff]
        %943 = vmatprep.subr.mxu0 0.0
        %944 = vmatpush1.msra.mxu0 %v927
        %945 = vmatprep.subr.mxu0 0.0
        %946 = vmatpush1.msra.mxu0 %v928
        %947 = vmatprep.subr.mxu0 0.0
        %948 = vmatpush1.msra.mxu0 %v929
        %949 = vmatprep.subr.mxu0 0.0
        %950 = vmatpush1.msra.mxu0 %v930
        %951 = vmatprep.subr.mxu0 0.0
        %952 = vmatpush1.msra.mxu0 %v931
        %953 = vmatprep.subr.mxu0 0.0
        %954 = vmatpush1.msra.mxu0 %v932
        %955 = vmatprep.subr.mxu0 0.0
        %956 = vmatpush1.msra.mxu0 %v933
        %957 = vmatprep.subr.mxu0 0.0
        %958 = vmatpush1.msra.mxu0 %v934
        %959 = vmatprep.subr.mxu0 0.0
        %960 = vmatpush1.msra.mxu0 %v935
        %961 = vmatprep.subr.mxu0 0.0
        %962 = vmatpush1.msra.mxu0 %v936
        %963 = vmatprep.subr.mxu0 0.0
        %964 = vmatpush1.msra.mxu0 %v937
        %965 = vmatprep.subr.mxu0 0.0
        %966 = vmatpush1.msra.mxu0 %v938
        %967 = vmatprep.subr.mxu0 0.0
        %968 = vmatpush1.msra.mxu0 %v939
        %969 = vmatprep.subr.mxu0 0.0
        %970 = vmatpush1.msra.mxu0 %v940
        %971 = vmatprep.subr.mxu0 0.0
        %972 = vmatpush1.msra.mxu0 %v941
        %973 = vmatprep.subr.mxu0 0.0
        %974 = vmatpush1.msra.mxu0 %v942
        %975 = vmatprep.subr.mxu0 0.0
        %976 = vmatpush1.msra.mxu0 0.0
        %977 = vmatprep.subr.mxu0 0.0
        %978 = vmatpush1.msra.mxu0 0.0
        %979 = vmatprep.subr.mxu0 0.0
        %980 = vmatpush1.msra.mxu0 0.0
        %981 = vmatprep.subr.mxu0 0.0
        %982 = vmatpush1.msra.mxu0 0.0
        %983 = vmatprep.subr.mxu0 0.0
        %984 = vmatpush1.msra.mxu0 0.0
        %985 = vmatprep.subr.mxu0 0.0
        %986 = vmatpush1.msra.mxu0 0.0
        %987 = vmatprep.subr.mxu0 0.0
        %988 = vmatpush1.msra.mxu0 0.0
        %989 = vmatprep.subr.mxu0 0.0
        %990 = vmatpush1.msra.mxu0 0.0
        %991 = vmatprep.subr.mxu0 0.0
        %992 = vmatpush1.msra.mxu0 0.0
        %993 = vmatprep.subr.mxu0 0.0
        %994 = vmatpush1.msra.mxu0 0.0
        %995 = vmatprep.subr.mxu0 0.0
        %996 = vmatpush1.msra.mxu0 0.0
        %997 = vmatprep.subr.mxu0 0.0
        %998 = vmatpush1.msra.mxu0 0.0
        %999 = vmatprep.subr.mxu0 0.0
        %1000 = vmatpush1.msra.mxu0 0.0
        %1001 = vmatprep.subr.mxu0 0.0
        %1002 = vmatpush1.msra.mxu0 0.0
        %1003 = vmatprep.subr.mxu0 0.0
        %1004 = vmatpush1.msra.mxu0 0.0
        %1005 = vmatprep.subr.mxu0 0.0
        %1006 = vmatpush1.msra.mxu0 0.0
        %1007 = vmatprep.mubr.f32.mxu0 0.0
        %1008 = vmatmul.mubr.f32.gmra.mrb[0].mxu0 %v844
        %v1009 = vpop.f32.mrb[0].mxu0
        %v1010 = vadd.f32 0.0, %v1009
        %v1011 = vpop.f32.mrb[0].mxu0
        %1012 = vmatprep.mubr.f32.mxu0 0.0
        %1013 = vmatmul.mubr.f32.gmra.mrb[0].mxu0 %v849
        %v1014 = vpop.f32.mrb[0].mxu0
        %v1015 = vadd.f32 0.0, %v1014
        %v1016 = vpop.f32.mrb[0].mxu0
        %1017 = vdwg.mxu0
        %v1019 = vlaneseq
        %v1020 = vshrl.u32 %v1019, 7
        %v1021 = vsub.s32 0, %v1020
        %v1022 = vrot.slane %v776, %v1021
        %v1024 = vadd.f32 %v1022, %v1010
        %v1025 = vadd.f32 %v1022, %v1015
        %v1026 = vld [vmem:[#allocation7 + $0x80] sm:$0xff]
        %v1027 = vld [vmem:[#allocation7 + $0x88] sm:$0xff]
        %v1028 = vld [vmem:[#allocation7 + $0x90] sm:$0xff]
        %v1029 = vld [vmem:[#allocation7 + $0x98] sm:$0xff]
        %v1030 = vld [vmem:[#allocation7 + $0xa0] sm:$0xff]
        %v1031 = vld [vmem:[#allocation7 + $0xa8] sm:$0xff]
        %v1032 = vld [vmem:[#allocation7 + $0xb0] sm:$0xff]
        %v1033 = vld [vmem:[#allocation7 + $0xb8] sm:$0xff]
        %v1034 = vld [vmem:[#allocation7 + $0xc0] sm:$0xff]
        %v1035 = vld [vmem:[#allocation7 + $0xc8] sm:$0xff]
        %v1036 = vld [vmem:[#allocation7 + $0xd0] sm:$0xff]
        %v1037 = vld [vmem:[#allocation7 + $0xd8] sm:$0xff]
        %v1038 = vld [vmem:[#allocation7 + $0xe0] sm:$0xff]
        %v1039 = vld [vmem:[#allocation7 + $0xe8] sm:$0xff]
        %v1040 = vld [vmem:[#allocation7 + $0xf0] sm:$0xff]
        %v1041 = vld [vmem:[#allocation7 + $0xf8] sm:$0xff]
        %1042 = vmatprep.subr.mxu0 0.0
        %1043 = vmatpush1.msra.mxu0 %v1026
        %1044 = vmatprep.subr.mxu0 0.0
        %1045 = vmatpush1.msra.mxu0 %v1027
        %1046 = vmatprep.subr.mxu0 0.0
        %1047 = vmatpush1.msra.mxu0 %v1028
        %1048 = vmatprep.subr.mxu0 0.0
        %1049 = vmatpush1.msra.mxu0 %v1029
        %1050 = vmatprep.subr.mxu0 0.0
        %1051 = vmatpush1.msra.mxu0 %v1030
        %1052 = vmatprep.subr.mxu0 0.0
        %1053 = vmatpush1.msra.mxu0 %v1031
        %1054 = vmatprep.subr.mxu0 0.0
        %1055 = vmatpush1.msra.mxu0 %v1032
        %1056 = vmatprep.subr.mxu0 0.0
        %1057 = vmatpush1.msra.mxu0 %v1033
        %1058 = vmatprep.subr.mxu0 0.0
        %1059 = vmatpush1.msra.mxu0 %v1034
        %1060 = vmatprep.subr.mxu0 0.0
        %1061 = vmatpush1.msra.mxu0 %v1035
        %1062 = vmatprep.subr.mxu0 0.0
        %1063 = vmatpush1.msra.mxu0 %v1036
        %1064 = vmatprep.subr.mxu0 0.0
        %1065 = vmatpush1.msra.mxu0 %v1037
        %1066 = vmatprep.subr.mxu0 0.0
        %1067 = vmatpush1.msra.mxu0 %v1038
        %1068 = vmatprep.subr.mxu0 0.0
        %1069 = vmatpush1.msra.mxu0 %v1039
        %1070 = vmatprep.subr.mxu0 0.0
        %1071 = vmatpush1.msra.mxu0 %v1040
        %1072 = vmatprep.subr.mxu0 0.0
        %1073 = vmatpush1.msra.mxu0 %v1041
        %1074 = vmatprep.subr.mxu0 0.0
        %1075 = vmatpush1.msra.mxu0 0.0
        %1076 = vmatprep.subr.mxu0 0.0
        %1077 = vmatpush1.msra.mxu0 0.0
        %1078 = vmatprep.subr.mxu0 0.0
        %1079 = vmatpush1.msra.mxu0 0.0
        %1080 = vmatprep.subr.mxu0 0.0
        %1081 = vmatpush1.msra.mxu0 0.0
        %1082 = vmatprep.subr.mxu0 0.0
        %1083 = vmatpush1.msra.mxu0 0.0
        %1084 = vmatprep.subr.mxu0 0.0
        %1085 = vmatpush1.msra.mxu0 0.0
        %1086 = vmatprep.subr.mxu0 0.0
        %1087 = vmatpush1.msra.mxu0 0.0
        %1088 = vmatprep.subr.mxu0 0.0
        %1089 = vmatpush1.msra.mxu0 0.0
        %1090 = vmatprep.subr.mxu0 0.0
        %1091 = vmatpush1.msra.mxu0 0.0
        %1092 = vmatprep.subr.mxu0 0.0
        %1093 = vmatpush1.msra.mxu0 0.0
        %1094 = vmatprep.subr.mxu0 0.0
        %1095 = vmatpush1.msra.mxu0 0.0
        %1096 = vmatprep.subr.mxu0 0.0
        %1097 = vmatpush1.msra.mxu0 0.0
        %1098 = vmatprep.subr.mxu0 0.0
        %1099 = vmatpush1.msra.mxu0 0.0
        %1100 = vmatprep.subr.mxu0 0.0
        %1101 = vmatpush1.msra.mxu0 0.0
        %1102 = vmatprep.subr.mxu0 0.0
        %1103 = vmatpush1.msra.mxu0 0.0
        %1104 = vmatprep.subr.mxu0 0.0
        %1105 = vmatpush1.msra.mxu0 0.0
        %1106 = vmatprep.mubr.f32.mxu0 0.0
        %1107 = vmatmul.mubr.f32.gmra.mrb[0].mxu0 %v774
        %v1108 = vpop.f32.mrb[0].mxu0
        %v1109 = vadd.f32 0.0, %v1108
        %v1110 = vpop.f32.mrb[0].mxu0
        %1111 = vmatprep.mubr.f32.mxu0 0.0
        %1112 = vmatmul.mubr.f32.gmra.mrb[0].mxu0 %v775
        %v1113 = vpop.f32.mrb[0].mxu0
        %v1114 = vadd.f32 0.0, %v1113
        %v1115 = vpop.f32.mrb[0].mxu0
        %1116 = vdwg.mxu0
        %v1117 = vadd.f32 %v1024, %v1109
        %v1118 = vadd.f32 %v1025, %v1114
        %v1119 = vld [vmem:[#allocation7 + $0x100] sm:$0xff]
        %v1120 = vld [vmem:[#allocation7 + $0x108] sm:$0xff]
        %v1121 = vld [vmem:[#allocation7 + $0x110] sm:$0xff]
        %v1122 = vld [vmem:[#allocation7 + $0x118] sm:$0xff]
        %v1123 = vld [vmem:[#allocation7 + $0x120] sm:$0xff]
        %v1124 = vld [vmem:[#allocation7 + $0x128] sm:$0xff]
        %v1125 = vld [vmem:[#allocation7 + $0x130] sm:$0xff]
        %v1126 = vld [vmem:[#allocation7 + $0x138] sm:$0xff]
        %v1127 = vld [vmem:[#allocation7 + $0x140] sm:$0xff]
        %v1128 = vld [vmem:[#allocation7 + $0x148] sm:$0xff]
        %v1129 = vld [vmem:[#allocation7 + $0x150] sm:$0xff]
        %v1130 = vld [vmem:[#allocation7 + $0x158] sm:$0xff]
        %v1131 = vld [vmem:[#allocation7 + $0x160] sm:$0xff]
        %v1132 = vld [vmem:[#allocation7 + $0x168] sm:$0xff]
        %v1133 = vld [vmem:[#allocation7 + $0x170] sm:$0xff]
        %v1134 = vld [vmem:[#allocation7 + $0x178] sm:$0xff]
        %1135 = vmatprep.subr.mxu0 0.0
        %1136 = vmatpush1.msra.mxu0 %v1119
        %1137 = vmatprep.subr.mxu0 0.0
        %1138 = vmatpush1.msra.mxu0 %v1120
        %1139 = vmatprep.subr.mxu0 0.0
        %1140 = vmatpush1.msra.mxu0 %v1121
        %1141 = vmatprep.subr.mxu0 0.0
        %1142 = vmatpush1.msra.mxu0 %v1122
        %1143 = vmatprep.subr.mxu0 0.0
        %1144 = vmatpush1.msra.mxu0 %v1123
        %1145 = vmatprep.subr.mxu0 0.0
        %1146 = vmatpush1.msra.mxu0 %v1124
        %1147 = vmatprep.subr.mxu0 0.0
        %1148 = vmatpush1.msra.mxu0 %v1125
        %1149 = vmatprep.subr.mxu0 0.0
        %1150 = vmatpush1.msra.mxu0 %v1126
        %1151 = vmatprep.subr.mxu0 0.0
        %1152 = vmatpush1.msra.mxu0 %v1127
        %1153 = vmatprep.subr.mxu0 0.0
        %1154 = vmatpush1.msra.mxu0 %v1128
        %1155 = vmatprep.subr.mxu0 0.0
        %1156 = vmatpush1.msra.mxu0 %v1129
        %1157 = vmatprep.subr.mxu0 0.0
        %1158 = vmatpush1.msra.mxu0 %v1130
        %1159 = vmatprep.subr.mxu0 0.0
        %1160 = vmatpush1.msra.mxu0 %v1131
        %1161 = vmatprep.subr.mxu0 0.0
        %1162 = vmatpush1.msra.mxu0 %v1132
        %1163 = vmatprep.subr.mxu0 0.0
        %1164 = vmatpush1.msra.mxu0 %v1133
        %1165 = vmatprep.subr.mxu0 0.0
        %1166 = vmatpush1.msra.mxu0 %v1134
        %1167 = vmatprep.subr.mxu0 0.0
        %1168 = vmatpush1.msra.mxu0 0.0
        %1169 = vmatprep.subr.mxu0 0.0
        %1170 = vmatpush1.msra.mxu0 0.0
        %1171 = vmatprep.subr.mxu0 0.0
        %1172 = vmatpush1.msra.mxu0 0.0
        %1173 = vmatprep.subr.mxu0 0.0
        %1174 = vmatpush1.msra.mxu0 0.0
        %1175 = vmatprep.subr.mxu0 0.0
        %1176 = vmatpush1.msra.mxu0 0.0
        %1177 = vmatprep.subr.mxu0 0.0
        %1178 = vmatpush1.msra.mxu0 0.0
        %1179 = vmatprep.subr.mxu0 0.0
        %1180 = vmatpush1.msra.mxu0 0.0
        %1181 = vmatprep.subr.mxu0 0.0
        %1182 = vmatpush1.msra.mxu0 0.0
        %1183 = vmatprep.subr.mxu0 0.0
        %1184 = vmatpush1.msra.mxu0 0.0
        %1185 = vmatprep.subr.mxu0 0.0
        %1186 = vmatpush1.msra.mxu0 0.0
        %1187 = vmatprep.subr.mxu0 0.0
        %1188 = vmatpush1.msra.mxu0 0.0
        %1189 = vmatprep.subr.mxu0 0.0
        %1190 = vmatpush1.msra.mxu0 0.0
        %1191 = vmatprep.subr.mxu0 0.0
        %1192 = vmatpush1.msra.mxu0 0.0
        %1193 = vmatprep.subr.mxu0 0.0
        %1194 = vmatpush1.msra.mxu0 0.0
        %1195 = vmatprep.subr.mxu0 0.0
        %1196 = vmatpush1.msra.mxu0 0.0
        %1197 = vmatprep.subr.mxu0 0.0
        %1198 = vmatpush1.msra.mxu0 0.0
        %1199 = vmatprep.mubr.f32.mxu0 0.0
        %1200 = vmatmul.mubr.f32.gmra.mrb[0].mxu0 %v919
        %v1201 = vpop.f32.mrb[0].mxu0
        %v1202 = vadd.f32 0.0, %v1201
        %v1203 = vpop.f32.mrb[0].mxu0
        %1204 = vmatprep.mubr.f32.mxu0 0.0
        %1205 = vmatmul.mubr.f32.gmra.mrb[0].mxu0 %v924
        %v1206 = vpop.f32.mrb[0].mxu0
        %v1207 = vadd.f32 0.0, %v1206
        %v1208 = vpop.f32.mrb[0].mxu0
        %1209 = vdwg.mxu0
        %v1210 = vadd.f32 %v1117, %v1202
        %v1211 = vadd.f32 %v1118, %v1207
        %1212 = vst [vmem:[%s309] sm:$0xff] %v1210
        %1213 = vst [vmem:[%s309 + $0x8] sm:$0xff] %v1211
        %s1214 = sand.u32 %s146, 1
        %s1215 = scalar_lea.sflag [#allocation4], %s1214
        %s1216 = sand.u32 %s146, 1
        %s1217 = smul.addr %s1216, 16
        %s1218 = scalar_lea.vmem [#allocation8], %s1217
        %s1219 = sand.u32 %s172, 1
        %s1220 = scalar_lea.sflag [#allocation10], %s1219
        %s1221 = sand.u32 %s172, 1
        %s1222 = smul.addr %s1221, 16
        %s1223 = scalar_lea.vmem [#allocation9], %s1222
        // Predicated region
        $region53: #{tpu_custom_call.1} parent=39 // pred_check
          %p1224 = pneg %p156
        $region54: #{tpu_custom_call.1} parent=39 // pred_check_branch
          %1226 = sbr.rel (%p1224) target = $region56
        $region55: #{tpu_custom_call.1} parent=39 // pred_region
          %s1228 = ssub.s32 256, 256
          %1229 = vsyncadd %s1215, %s1228
          %s1230 = smul.addr %s28, 2
          %s1231 = smul.addr %s1230, 128
          %s1232 = scalar_lea.hbm %s5, %s1231
          %s1233 = sshll.u32 %s1218, 4
          %s1234 = int_to_ptr.vmem [resolvable:$true] %s1233
          %1239 = dma.vmem_to_hbm [thread:$0]  %s1234, 256, %s1232, %s1215, 128, 128, 8
        $region56: #{tpu_custom_call.1} parent=39 // pred_fallthru
          _
        // Predicated region
        $region57: #{tpu_custom_call.1} parent=39 // pred_check
          %p1240 = pneg %p182
        $region58: #{tpu_custom_call.1} parent=39 // pred_check_branch
          %1242 = sbr.rel (%p1240) target = $region60
        $region59: #{tpu_custom_call.1} parent=39 // pred_region
          %s1244 = ssub.s32 256, 256
          %1245 = vsyncadd %s1220, %s1244
          %s1246 = smul.addr %s28, 2
          %s1247 = smul.addr %s1246, 128
          %s1248 = scalar_lea.hbm %s6, %s1247
          %s1249 = sshll.u32 %s1223, 4
          %s1250 = int_to_ptr.vmem [resolvable:$true] %s1249
          %1255 = dma.vmem_to_hbm [thread:$0]  %s1250, 256, %s1248, %s1220, 128, 128, 8
        $region60: #{tpu_custom_call.1} parent=39 // pred_fallthru
          _
      $region40: #{tpu_custom_call.1} parent=5 // pred_fallthru
        _
      %p1256 = scmp.le.s32.totalorder 2, %s23
      // Predicated region
      $region61: #{tpu_custom_call.1} parent=5 // pred_check
        %p1257 = pneg %p1256
      $region62: #{tpu_custom_call.1} parent=5 // pred_check_branch
        %1259 = sbr.rel (%p1257) target = $region64
      $region63: #{tpu_custom_call.1} parent=5 // pred_region
        %s1260 = ssub.s32 %s23, 2
        // Predicated region
        $region65: #{tpu_custom_call.1} parent=63 // pred_check
          %p1261 = pneg %p162
        $region66: #{tpu_custom_call.1} parent=63 // pred_check_branch
          %1263 = sbr.rel (%p1261) target = $region68
        $region67: #{tpu_custom_call.1} parent=63 // pred_region
          %s1264 = sand.u32 %s147, 1
          %s1265 = scalar_lea.sflag [#allocation4], %s1264
          %s1266 = sand.u32 %s147, 1
          %s1267 = smul.addr %s1266, 16
          %s1268 = scalar_lea.vmem [#allocation8], %s1267
          %1269 = dma.done %s1265, 256
        $region68: #{tpu_custom_call.1} parent=63 // pred_fallthru
          _
        // Predicated region
        $region69: #{tpu_custom_call.1} parent=63 // pred_check
          %p1270 = pneg %p188
        $region70: #{tpu_custom_call.1} parent=63 // pred_check_branch
          %1272 = sbr.rel (%p1270) target = $region72
        $region71: #{tpu_custom_call.1} parent=63 // pred_region
          %s1273 = sand.u32 %s173, 1
          %s1274 = scalar_lea.sflag [#allocation10], %s1273
          %s1275 = sand.u32 %s173, 1
          %s1276 = smul.addr %s1275, 16
          %s1277 = scalar_lea.vmem [#allocation9], %s1276
          %1278 = dma.done %s1274, 256
        $region72: #{tpu_custom_call.1} parent=63 // pred_fallthru
          _
      $region64: #{tpu_custom_call.1} parent=5 // pred_fallthru
        _
    $region6: #{tpu_custom_call.1} parent=1 // loop_footer
      %s27 = sadd.s32 1, %s23
    $region7: #{tpu_custom_call.1} parent=1 // loop_footer_branch
      %22 = sbr.rel target = $region3
    $region8: #{tpu_custom_call.1} parent=1 // loop_exit
      _
    %1279 = vsyncpa [#allocation3], 1
    %s1280 = scalar_lea.sflag [#allocation3], 1
    %1281 = vsyncpa %s1280, 1
    %1282 = vsyncpa [#allocation6], 1
    %1283 = vsyncpa [#allocation4], 1
    %s1284 = scalar_lea.sflag [#allocation4], 1
    %1285 = vsyncpa %s1284, 1
    %1286 = vsyncpa [#allocation10], 1
    %s1287 = scalar_lea.sflag [#allocation10], 1
    %1288 = vsyncpa %s1287, 1

</llo_original>
